<compile_context>
chip_gen: v5e
topology: v5e:2x2
jax: 0.10.0
libtpu: 0.0.40
codegen_flags: <defaults>
</compile_context>

<pallas_src>
from functools import partial

import jax
import jax.numpy as jnp
from jax import lax
from jax.experimental import pallas as pl
from jax.experimental.pallas import tpu as pltpu

_LANES = 128
_SUBLANES = 8


def _round_up(x, m):
    return (x + m - 1) // m * m


def _fold_bn(gamma, beta, mean, var, eps=1e-5):
    scale = gamma / jnp.sqrt(var + eps)
    shift = beta - mean * scale
    return scale, shift


# ---------------------------------------------------------------------------
# Fused Bottleneck kernel — one grid step = one (batch, H-tile) output tile.
# ---------------------------------------------------------------------------

def _bottleneck_kernel(x_hbm, w1_ref, b1_ref, w2_ref, b2_ref, w3_ref, b3_ref,
                       o_ref, xbuf, sem, *, th, W, rows_per_img):
    # x_hbm : (N*(H+2), W2, Cin_p)  padded input, stays in HBM (pl.ANY)
    # w1    : (Cin_p, Cm_p)         BN1 scale folded in, compute dtype
    # w2    : (9*Cm_p, Cm_p)        BN2 scale folded in, rows ordered (dy,dx,cin)
    # w3    : (Cm_p, Cout_p)        BN3 scale folded in
    # b*    : (1, C) float32        BN shifts
    # o_ref : (1, th, W, Cout_p)
    # xbuf  : (2, th+2, W2, Cin_p)  manual double buffer for the haloed window
    n = pl.program_id(0)
    h = pl.program_id(1)
    ht = pl.num_programs(1)

    W2 = xbuf.shape[2]
    cin_p = xbuf.shape[3]
    cm_p = w1_ref.shape[1]
    cout_p = w3_ref.shape[1]
    cdt = w1_ref.dtype                       # compute (matmul) dtype

    # ---- manual double-buffered DMA of the haloed (th+2)-row window --------
    def window_copy(h_idx, slot):
        start = n * rows_per_img + h_idx * th
        return pltpu.make_async_copy(
            x_hbm.at[pl.ds(start, th + 2)], xbuf.at[slot], sem.at[slot])

    @pl.when(h == 0)
    def _():                                 # first tile of this image: fetch now
        window_copy(0, 0).start()

    slot = h % 2
    window_copy(h, slot).wait()

    @pl.when(h + 1 < ht)
    def _():                                 # prefetch next tile's window
        window_copy(h + 1, (h + 1) % 2).start()

    xw = xbuf[slot]                          # (th+2, W2, Cin_p), compute dtype

    # ---- conv1 (1x1) + folded bn1 + relu on the whole haloed window --------
    m1 = (th + 2) * W2
    a1 = jnp.dot(xw.reshape(m1, cin_p), w1_ref[...],
                 preferred_element_type=jnp.float32)
    out1 = jnp.maximum(a1 + b1_ref[...], 0.0).reshape(th + 2, W2, cm_p)

    # Zero the positions that correspond to the *image* zero padding so conv2
    # sees true zeros (conv1(0) + shift is not zero).  Mask construction is
    # O(th + W2): a (1,W2,1) column mask plus a first/last-tile row mask.
    col = lax.broadcasted_iota(jnp.int32, (1, W2, 1), 1)
    col_ok = (col >= 1) & (col <= W)
    row = lax.broadcasted_iota(jnp.int32, (th + 2, 1, 1), 0)
    row_ok = jnp.logical_and(
        jnp.logical_or(row != 0, jnp.logical_not(h == 0)),
        jnp.logical_or(row != th + 1, jnp.logical_not(h == ht - 1)))
    mask = jnp.logical_and(row_ok, col_ok).astype(jnp.float32)  # (th+2, W2, 1)
    out1 = (out1 * mask).astype(cdt)

    # ---- conv2 (3x3, stride 1) + folded bn2 + relu: one dot, K = 9*Cm_p ----
    cols = []
    for dy in range(3):
        slab = out1[dy:dy + th]                                 # (th, W2, Cm_p)
        for dx in range(3):
            cols.append(slab[:, dx:dx + W, :])
    patch = jnp.concatenate(cols, axis=-1).reshape(th * W, 9 * cm_p)
    a2 = jnp.dot(patch, w2_ref[...], preferred_element_type=jnp.float32)
    out2 = jnp.maximum(a2 + b2_ref[...], 0.0).astype(cdt)       # (th*W, Cm_p)

    # ---- conv3 (1x1) + folded bn3 + identity residual + relu ---------------
    res = xw[1:th + 1, 1:W + 1, :].reshape(th * W, cin_p).astype(jnp.float32)
    y = jnp.dot(out2, w3_ref[...], preferred_element_type=jnp.float32)
    y = jnp.maximum(y + b3_ref[...] + res, 0.0)
    o_ref[...] = y.reshape(1, th, W, cout_p).astype(o_ref.dtype)


# ---------------------------------------------------------------------------
# VMEM-aware tile selection
# ---------------------------------------------------------------------------

def _step_vmem_bytes(th, W, W2, cin_p, cm_p, cout_p, cbytes, obytes):
    win = 2 * (th + 2) * W2 * cin_p * cbytes                    # DMA double buffer
    wts = 2 * (cin_p * cm_p + 9 * cm_p * cm_p + cm_p * cout_p) * cbytes
    wts += 2 * (2 * cm_p + cout_p) * 4                          # biases
    outb = 2 * th * W * cout_p * obytes                         # output double buffer
    tmp = ((th + 2) * W2 * cm_p * (4 + cbytes)                  # conv1 out (f32+cast)
           + th * W * (9 * cm_p * cbytes                        # im2col patch
                       + cm_p * (4 + cbytes)                    # conv2 acc/out2
                       + cout_p * 4                             # conv3 acc
                       + cin_p * 4))                            # residual
    return win + wts + outb + tmp


def _choose_tile_h(H, W, W2, cin_p, cm_p, cout_p, cbytes, obytes,
                   budget=24 << 20):
    best = 1
    for th in range(1, H + 1):
        if H % th == 0 and _step_vmem_bytes(th, W, W2, cin_p, cm_p, cout_p,
                                            cbytes, obytes) <= budget:
            best = th
    return best


# ---------------------------------------------------------------------------
# Wrappers
# ---------------------------------------------------------------------------

def bottleneck_forward_nhwc(x_nhwc, p, *, tile_h=None, eps=1e-5,
                            compute_dtype=jnp.bfloat16,
                            out_dtype=jnp.float32):
    """Fused Bottleneck on NHWC input.  Returns channel-padded NHWC
    (N, H, W, Cout_p) so consecutive blocks can chain without boundary passes.
    """
    N, H, W, Cin = x_nhwc.shape
    Cmid = p["w1"].shape[1]
    Cout = p["w3"].shape[1]
    assert Cin == Cout, "stride=1 / downsample=None path requires Cin == Cout"

    cin_p = _round_up(Cin, _LANES)
    cm_p = _round_up(Cmid, _LANES)
    cout_p = cin_p                          # Cin == Cout
    W2 = _round_up(W + 2, _SUBLANES)        # +1 halo each side, sublane aligned
    cbytes = jnp.dtype(compute_dtype).itemsize
    obytes = jnp.dtype(out_dtype).itemsize

    # Fold BN (eval mode) into the conv weights; cast weights once.
    s1, b1 = _fold_bn(p["gamma1"], p["beta1"], p["mean1"], p["var1"], eps)
    s2, b2 = _fold_bn(p["gamma2"], p["beta2"], p["mean2"], p["var2"], eps)
    s3, b3 = _fold_bn(p["gamma3"], p["beta3"], p["mean3"], p["var3"], eps)
    w1 = p["w1"] * s1[None, :]                                  # (Cin, Cmid)
    w2 = p["w2"] * s2[None, None, None, :]                      # (3,3,Cmid,Cmid) HWIO
    w3 = p["w3"] * s3[None, :]                                  # (Cmid, Cout)

    # Zero-pad channels to the lane width; padded channels stay exactly zero.
    w1p = jnp.zeros((cin_p, cm_p), compute_dtype
                    ).at[:Cin, :Cmid].set(w1.astype(compute_dtype))
    w2p = jnp.zeros((3, 3, cm_p, cm_p), compute_dtype
                    ).at[:, :, :Cmid, :Cmid].set(w2.astype(compute_dtype)
                    ).reshape(9 * cm_p, cm_p)                   # rows: (dy, dx, cin)
    w3p = jnp.zeros((cm_p, cout_p), compute_dtype
                    ).at[:Cmid, :Cout].set(w3.astype(compute_dtype))
    b1p = jnp.zeros((1, cm_p), jnp.float32).at[:, :Cmid].set(b1[None, :])
    b2p = jnp.zeros((1, cm_p), jnp.float32).at[:, :Cmid].set(b2[None, :])
    b3p = jnp.zeros((1, cout_p), jnp.float32).at[:, :Cout].set(b3[None, :])

    if tile_h is None:
        tile_h = _choose_tile_h(H, W, W2, cin_p, cm_p, cout_p, cbytes, obytes)
    assert H % tile_h == 0, (H, tile_h)
    ht = H // tile_h

    # Single padded NHWC array in HBM; kernel DMAs overlapping windows itself.
    xpad = jnp.pad(x_nhwc.astype(compute_dtype),
                   ((0, 0), (1, 1), (1, W2 - W - 1), (0, cin_p - Cin)))
    xpad = xpad.reshape(N * (H + 2), W2, cin_p)

    est = _step_vmem_bytes(tile_h, W, W2, cin_p, cm_p, cout_p, cbytes, obytes)
    vmem_limit = int(min(max(2 * est, 32 << 20), 64 << 20))

    kernel = partial(_bottleneck_kernel, th=tile_h, W=W, rows_per_img=H + 2)

    return pl.pallas_call(
        kernel,
        out_shape=jax.ShapeDtypeStruct((N, H, W, cout_p), out_dtype),
        grid=(N, ht),
        in_specs=[
            pl.BlockSpec(memory_space=pl.ANY),                  # padded input (HBM)
            pl.BlockSpec((cin_p, cm_p), lambda n, h: (0, 0)),
            pl.BlockSpec((1, cm_p), lambda n, h: (0, 0)),
            pl.BlockSpec((9 * cm_p, cm_p), lambda n, h: (0, 0)),
            pl.BlockSpec((1, cm_p), lambda n, h: (0, 0)),
            pl.BlockSpec((cm_p, cout_p), lambda n, h: (0, 0)),
            pl.BlockSpec((1, cout_p), lambda n, h: (0, 0)),
        ],
        out_specs=pl.BlockSpec((1, tile_h, W, cout_p),
                               lambda n, h: (n, h, 0, 0)),
        scratch_shapes=[
            pltpu.VMEM((2, tile_h + 2, W2, cin_p), compute_dtype),
            pltpu.SemaphoreType.DMA((2,)),
        ],
        compiler_params=pltpu.CompilerParams(
            # batch axis "parallel" (v7x megacore; keep N*ht >= 2), H axis
            # "arbitrary" so the within-image DMA prefetch chain is sequential.
            dimension_semantics=("parallel", "arbitrary"),
            vmem_limit_bytes=vmem_limit),
    )(xpad, w1p, b1p, w2p, b2p, w3p, b3p)


def bottleneck_forward(x_nchw, p, **kwargs):
    """PyTorch-boundary wrapper: NCHW in, NCHW out.

    NOTE: the NCHW<->NHWC transposes and the channel-padding slice are extra
    HBM passes; when chaining blocks, use bottleneck_forward_nhwc directly and
    keep activations in padded NHWC.
    """
    Cout = p["w3"].shape[1]
    x_nhwc = jnp.transpose(x_nchw, (0, 2, 3, 1))
    y = bottleneck_forward_nhwc(x_nhwc, p, **kwargs)
    return jnp.transpose(y[..., :Cout], (0, 3, 1, 2))


# ---------------------------------------------------------------------------
# Pure-JAX reference (for correctness check)
# ---------------------------------------------------------------------------

def reference_forward(x_nchw, p, eps=1e-5):
    x = jnp.transpose(x_nchw, (0, 2, 3, 1)).astype(jnp.float32)

    def bn(y, g, b, m, v):
        return (y - m) / jnp.sqrt(v + eps) * g + b

    y = jnp.einsum("nhwc,cd->nhwd", x, p["w1"])
    y = jax.nn.relu(bn(y, p["gamma1"], p["beta1"], p["mean1"], p["var1"]))
    y = jax.lax.conv_general_dilated(
        y, p["w2"], (1, 1), "SAME",
        dimension_numbers=("NHWC", "HWIO", "NHWC"))
    y = jax.nn.relu(bn(y, p["gamma2"], p["beta2"], p["mean2"], p["var2"]))
    y = jnp.einsum("nhwc,cd->nhwd", y, p["w3"])
    y = bn(y, p["gamma3"], p["beta3"], p["mean3"], p["var3"]) + x
    y = jax.nn.relu(y)
    return jnp.transpose(y, (0, 3, 1, 2))


# ---------------------------------------------------------------------------
# Deterministic parameter initialization
# ---------------------------------------------------------------------------

def init_params(key, in_channels, mid_channels, expansion=4):
    cout = mid_channels * expansion
    assert in_channels == cout, "downsample=None path needs Cin == Cmid*expansion"
    keys = jax.random.split(key, 15)
    p = {
        "w1": jax.random.normal(keys[0], (in_channels, mid_channels), jnp.float32) * 0.1,
        "w2": jax.random.normal(keys[1], (3, 3, mid_channels, mid_channels), jnp.float32) * 0.1,
        "w3": jax.random.normal(keys[2], (mid_channels, cout), jnp.float32) * 0.1,
    }
    for i, c in zip((1, 2, 3), (mid_channels, mid_channels, cout)):
        k = jax.random.split(keys[2 + i], 4)
        p[f"gamma{i}"] = jax.random.uniform(k[0], (c,), jnp.float32, 0.5, 1.5)
        p[f"beta{i}"] = jax.random.normal(k[1], (c,), jnp.float32) * 0.1
        p[f"mean{i}"] = jax.random.normal(k[2], (c,), jnp.float32) * 0.1
        p[f"var{i}"] = jax.random.uniform(k[3], (c,), jnp.float32, 0.5, 1.5)
    return p


# ---------------------------------------------------------------------------

if __name__ == "__main__":
    key = jax.random.PRNGKey(0)
    kx, kp = jax.random.split(key)

    N, H, W = 2, 16, 16
    mid_channels = 4
    in_channels = mid_channels * 4            # 16, so identity add is valid

    x = jax.random.normal(kx, (N, in_channels, H, W), jnp.float32)
    params = init_params(kp, in_channels, mid_channels)

    ref = reference_forward(x, params)

    # f32 compute path: tight tolerance (validates fusion / halo / mask logic).
    # tile_h=8 exercises the multi-tile halo + DMA-prefetch path (grid=(2,2)).
    fwd_f32 = jax.jit(lambda xx, pp: bottleneck_forward(
        xx, pp, tile_h=8, compute_dtype=jnp.float32))
    out_f32 = jax.block_until_ready(fwd_f32(x, params))
    assert out_f32.shape == (N, in_channels, H, W), out_f32.shape
    err_f32 = float(jnp.max(jnp.abs(out_f32 - ref)))
    assert jnp.allclose(out_f32, ref, atol=1e-4, rtol=1e-4), err_f32

    # bf16 compute path (default, recommended): loose tolerance.
    fwd_bf16 = jax.jit(lambda xx, pp: bottleneck_forward(xx, pp, tile_h=8))
    out_bf16 = jax.block_until_ready(fwd_bf16(x, params))
    err_bf16 = float(jnp.max(jnp.abs(out_bf16 - ref)))
    assert jnp.allclose(out_bf16, ref, atol=1e-1, rtol=5e-2), err_bf16

    print("KERNEL_OK")
</pallas_src>

<mosaic_0001>
module attributes {stable_mosaic.version = 11 : i64} {
  func.func @_bottleneck_kernel(%arg0: i32, %arg1: i32, %arg2: memref<36x24x128xf32, #tpu.memory_space<any>>, %arg3: memref<128x128xf32, #tpu.memory_space<vmem>>, %arg4: memref<1x128xf32, #tpu.memory_space<vmem>>, %arg5: memref<1152x128xf32, #tpu.memory_space<vmem>>, %arg6: memref<1x128xf32, #tpu.memory_space<vmem>>, %arg7: memref<128x128xf32, #tpu.memory_space<vmem>>, %arg8: memref<1x128xf32, #tpu.memory_space<vmem>>, %arg9: memref<1x8x16x128xf32, #tpu.memory_space<vmem>>, %arg10: memref<2x10x24x128xf32, #tpu.memory_space<vmem>>, %arg11: memref<2x!tpu.dma_semaphore, #tpu.memory_space<semaphore_mem>>) attributes {dimension_semantics = [#tpu.dimension_semantics<parallel>, #tpu.dimension_semantics<arbitrary>], iteration_bounds = array<i64: 2, 2>, scalar_prefetch = 0 : i64, scratch_operands = 2 : i64, tpu.core_type = #tpu.core_type<tc>, window_params = [{}, {pipeline_mode = #tpu.pipeline_mode<synchronous>, transform_indices = @transform_1, window_bounds = array<i64: 128, 128>}, {pipeline_mode = #tpu.pipeline_mode<synchronous>, transform_indices = @transform_2, window_bounds = array<i64: 1, 128>}, {pipeline_mode = #tpu.pipeline_mode<synchronous>, transform_indices = @transform_3, window_bounds = array<i64: 1152, 128>}, {pipeline_mode = #tpu.pipeline_mode<synchronous>, transform_indices = @transform_4, window_bounds = array<i64: 1, 128>}, {pipeline_mode = #tpu.pipeline_mode<synchronous>, transform_indices = @transform_5, window_bounds = array<i64: 128, 128>}, {pipeline_mode = #tpu.pipeline_mode<synchronous>, transform_indices = @transform_6, window_bounds = array<i64: 1, 128>}, {transform_indices = @transform_7, window_bounds = array<i64: 1, 8, 16, 128>}]} {
    %c0_i32 = arith.constant 0 : i32
    %0 = arith.cmpi eq, %arg1, %c0_i32 : i32
    %1 = arith.extui %0 : i1 to i32
    %c0_i32_0 = arith.constant 0 : i32
    %2 = arith.cmpi ne, %1, %c0_i32_0 : i32
    scf.if %2 {
      %c18_i32_41 = arith.constant 18 : i32
      %97 = arith.muli %arg0, %c18_i32_41 : i32
      %c0_i32_42 = arith.constant 0 : i32
      %98 = arith.addi %97, %c0_i32_42 : i32
      %c0_i32_43 = arith.constant 0 : i32
      %c0_i32_44 = arith.constant 0 : i32
      %c0_i32_45 = arith.constant 0 : i32
      %c0_i32_46 = arith.constant 0 : i32
      %99 = tpu.memref_slice %arg2[%98, %c0_i32_45, %c0_i32_46] : memref<36x24x128xf32, #tpu.memory_space<any>> -> memref<10x24x128xf32, #tpu.memory_space<any>>
      %c0_i32_47 = arith.constant 0 : i32
      %c0_i32_48 = arith.constant 0 : i32
      %c0_i32_49 = arith.constant 0 : i32
      %100 = tpu.memref_slice %arg10[%c0_i32_43, %c0_i32_47, %c0_i32_48, %c0_i32_49] : memref<2x10x24x128xf32, #tpu.memory_space<vmem>> -> memref<1x10x24x128xf32, #tpu.memory_space<vmem>>
      %101 = tpu.memref_squeeze %100 : memref<1x10x24x128xf32, #tpu.memory_space<vmem>> -> memref<10x24x128xf32, #tpu.memory_space<vmem>>
      %102 = tpu.memref_slice %arg11[%c0_i32_44] : memref<2x!tpu.dma_semaphore, #tpu.memory_space<semaphore_mem>> -> memref<1x!tpu.dma_semaphore, #tpu.memory_space<semaphore_mem>>
      %103 = tpu.memref_squeeze %102 : memref<1x!tpu.dma_semaphore, #tpu.memory_space<semaphore_mem>> -> memref<!tpu.dma_semaphore, #tpu.memory_space<semaphore_mem>>
      tpu.enqueue_dma source(%99 : memref<10x24x128xf32, #tpu.memory_space<any>>) target(%101 : memref<10x24x128xf32, #tpu.memory_space<vmem>>) target_semaphore(%103 : memref<!tpu.dma_semaphore, #tpu.memory_space<semaphore_mem>>)
    } else {
    }
    %c2_i32 = arith.constant 2 : i32
    %c0_i32_1 = arith.constant 0 : i32
    %3 = arith.cmpi eq, %c2_i32, %c0_i32_1 : i32
    %c1_i32 = arith.constant 1 : i32
    %4 = arith.select %3, %c1_i32, %c2_i32 : i32
    %5 = arith.remsi %arg1, %4 : i32
    %c0_i32_2 = arith.constant 0 : i32
    %6 = arith.cmpi ne, %5, %c0_i32_2 : i32
    %c0_i32_3 = arith.constant 0 : i32
    %7 = arith.cmpi slt, %5, %c0_i32_3 : i32
    %c0_i32_4 = arith.constant 0 : i32
    %8 = arith.cmpi slt, %4, %c0_i32_4 : i32
    %9 = arith.xori %7, %8 : i1
    %10 = arith.andi %9, %6 : i1
    %11 = arith.addi %5, %4 : i32
    %12 = arith.select %10, %11, %5 : i32
    %c18_i32 = arith.constant 18 : i32
    %13 = arith.muli %arg0, %c18_i32 : i32
    %c8_i32 = arith.constant 8 : i32
    %14 = arith.muli %arg1, %c8_i32 : i32
    %15 = arith.addi %13, %14 : i32
    %c0_i32_5 = arith.constant 0 : i32
    %c0_i32_6 = arith.constant 0 : i32
    %16 = tpu.memref_slice %arg2[%15, %c0_i32_5, %c0_i32_6] : memref<36x24x128xf32, #tpu.memory_space<any>> -> memref<10x24x128xf32, #tpu.memory_space<any>>
    %c0_i32_7 = arith.constant 0 : i32
    %c0_i32_8 = arith.constant 0 : i32
    %c0_i32_9 = arith.constant 0 : i32
    %17 = tpu.memref_slice %arg10[%12, %c0_i32_7, %c0_i32_8, %c0_i32_9] : memref<2x10x24x128xf32, #tpu.memory_space<vmem>> -> memref<1x10x24x128xf32, #tpu.memory_space<vmem>>
    %18 = tpu.memref_squeeze %17 : memref<1x10x24x128xf32, #tpu.memory_space<vmem>> -> memref<10x24x128xf32, #tpu.memory_space<vmem>>
    %19 = tpu.memref_slice %arg11[%12] : memref<2x!tpu.dma_semaphore, #tpu.memory_space<semaphore_mem>> -> memref<1x!tpu.dma_semaphore, #tpu.memory_space<semaphore_mem>>
    %20 = tpu.memref_squeeze %19 : memref<1x!tpu.dma_semaphore, #tpu.memory_space<semaphore_mem>> -> memref<!tpu.dma_semaphore, #tpu.memory_space<semaphore_mem>>
    tpu.wait_dma2 semaphore(%20 : memref<!tpu.dma_semaphore, #tpu.memory_space<semaphore_mem>>) src(%16 : memref<10x24x128xf32, #tpu.memory_space<any>>) dst(%18 : memref<10x24x128xf32, #tpu.memory_space<vmem>>)
    %c1_i32_10 = arith.constant 1 : i32
    %21 = arith.addi %arg1, %c1_i32_10 : i32
    %c2_i32_11 = arith.constant 2 : i32
    %22 = arith.cmpi slt, %21, %c2_i32_11 : i32
    %23 = arith.extui %22 : i1 to i32
    %c0_i32_12 = arith.constant 0 : i32
    %24 = arith.cmpi ne, %23, %c0_i32_12 : i32
    scf.if %24 {
      %c1_i32_41 = arith.constant 1 : i32
      %97 = arith.addi %arg1, %c1_i32_41 : i32
      %c1_i32_42 = arith.constant 1 : i32
      %98 = arith.addi %arg1, %c1_i32_42 : i32
      %c2_i32_43 = arith.constant 2 : i32
      %c0_i32_44 = arith.constant 0 : i32
      %99 = arith.cmpi eq, %c2_i32_43, %c0_i32_44 : i32
      %c1_i32_45 = arith.constant 1 : i32
      %100 = arith.select %99, %c1_i32_45, %c2_i32_43 : i32
      %101 = arith.remsi %98, %100 : i32
      %c0_i32_46 = arith.constant 0 : i32
      %102 = arith.cmpi ne, %101, %c0_i32_46 : i32
      %c0_i32_47 = arith.constant 0 : i32
      %103 = arith.cmpi slt, %101, %c0_i32_47 : i32
      %c0_i32_48 = arith.constant 0 : i32
      %104 = arith.cmpi slt, %100, %c0_i32_48 : i32
      %105 = arith.xori %103, %104 : i1
      %106 = arith.andi %105, %102 : i1
      %107 = arith.addi %101, %100 : i32
      %108 = arith.select %106, %107, %101 : i32
      %c18_i32_49 = arith.constant 18 : i32
      %109 = arith.muli %arg0, %c18_i32_49 : i32
      %c8_i32_50 = arith.constant 8 : i32
      %110 = arith.muli %97, %c8_i32_50 : i32
      %111 = arith.addi %109, %110 : i32
      %c0_i32_51 = arith.constant 0 : i32
      %c0_i32_52 = arith.constant 0 : i32
      %112 = tpu.memref_slice %arg2[%111, %c0_i32_51, %c0_i32_52] : memref<36x24x128xf32, #tpu.memory_space<any>> -> memref<10x24x128xf32, #tpu.memory_space<any>>
      %c0_i32_53 = arith.constant 0 : i32
      %c0_i32_54 = arith.constant 0 : i32
      %c0_i32_55 = arith.constant 0 : i32
      %113 = tpu.memref_slice %arg10[%108, %c0_i32_53, %c0_i32_54, %c0_i32_55] : memref<2x10x24x128xf32, #tpu.memory_space<vmem>> -> memref<1x10x24x128xf32, #tpu.memory_space<vmem>>
      %114 = tpu.memref_squeeze %113 : memref<1x10x24x128xf32, #tpu.memory_space<vmem>> -> memref<10x24x128xf32, #tpu.memory_space<vmem>>
      %115 = tpu.memref_slice %arg11[%108] : memref<2x!tpu.dma_semaphore, #tpu.memory_space<semaphore_mem>> -> memref<1x!tpu.dma_semaphore, #tpu.memory_space<semaphore_mem>>
      %116 = tpu.memref_squeeze %115 : memref<1x!tpu.dma_semaphore, #tpu.memory_space<semaphore_mem>> -> memref<!tpu.dma_semaphore, #tpu.memory_space<semaphore_mem>>
      tpu.enqueue_dma source(%112 : memref<10x24x128xf32, #tpu.memory_space<any>>) target(%114 : memref<10x24x128xf32, #tpu.memory_space<vmem>>) target_semaphore(%116 : memref<!tpu.dma_semaphore, #tpu.memory_space<semaphore_mem>>)
    } else {
    }
    %25 = arith.index_cast %12 : i32 to index
    %c0 = arith.constant 0 : index
    %c0_13 = arith.constant 0 : index
    %c0_14 = arith.constant 0 : index
    %26 = vector.load %arg10[%25, %c0, %c0_13, %c0_14] : memref<2x10x24x128xf32, #tpu.memory_space<vmem>>, vector<1x10x24x128xf32>
    %27 = vector.shape_cast %26 : vector<1x10x24x128xf32> to vector<10x24x128xf32>
    %28 = vector.shape_cast %27 : vector<10x24x128xf32> to vector<240x128xf32>
    %c0_15 = arith.constant 0 : index
    %c0_16 = arith.constant 0 : index
    %29 = vector.load %arg3[%c0_15, %c0_16] : memref<128x128xf32, #tpu.memory_space<vmem>>, vector<128x128xf32>
    %cst = arith.constant dense<0.000000e+00> : vector<240x128xf32>
    %30 = tpu.matmul %28, %29, %cst {dimension_numbers = #tpu.dot_dimension_numbers<[1], [0], [0], [1], [0, 0, 1, 1], [], []>} : vector<240x128xf32>, vector<128x128xf32>, vector<240x128xf32> -> vector<240x128xf32>
    %c0_17 = arith.constant 0 : index
    %c0_18 = arith.constant 0 : index
    %31 = vector.load %arg4[%c0_17, %c0_18] : memref<1x128xf32, #tpu.memory_space<vmem>>, vector<1x128xf32>
    %32 = vector.broadcast %31 : vector<1x128xf32> to vector<240x128xf32>
    %33 = arith.addf %30, %32 : vector<240x128xf32>
    %cst_19 = arith.constant 0.000000e+00 : f32
    %34 = vector.broadcast %cst_19 : f32 to vector<240x128xf32>
    %35 = arith.maximumf %33, %34 : vector<240x128xf32>
    %36 = vector.shape_cast %35 : vector<240x128xf32> to vector<10x24x128xf32>
    %37 = tpu.iota {dimensions = array<i32: 1>} : vector<1x24x1xi32>
    %c1_i32_20 = arith.constant 1 : i32
    %38 = vector.broadcast %c1_i32_20 : i32 to vector<1x24x1xi32>
    %39 = arith.cmpi sge, %37, %38 : vector<1x24x1xi32>
    %c16_i32 = arith.constant 16 : i32
    %40 = vector.broadcast %c16_i32 : i32 to vector<1x24x1xi32>
    %41 = arith.cmpi sle, %37, %40 : vector<1x24x1xi32>
    %42 = arith.andi %39, %41 : vector<1x24x1xi1>
    %43 = tpu.iota {dimensions = array<i32: 0>} : vector<10x1x1xi32>
    %c0_i32_21 = arith.constant 0 : i32
    %44 = vector.broadcast %c0_i32_21 : i32 to vector<10x1x1xi32>
    %45 = arith.cmpi ne, %43, %44 : vector<10x1x1xi32>
    %c0_i32_22 = arith.constant 0 : i32
    %46 = arith.cmpi eq, %arg1, %c0_i32_22 : i32
    %true = arith.constant true
    %47 = arith.xori %46, %true : i1
    %48 = vector.broadcast %47 : i1 to vector<10x1x1xi1>
    %49 = arith.ori %45, %48 : vector<10x1x1xi1>
    %c9_i32 = arith.constant 9 : i32
    %50 = vector.broadcast %c9_i32 : i32 to vector<10x1x1xi32>
    %51 = arith.cmpi ne, %43, %50 : vector<10x1x1xi32>
    %c1_i32_23 = arith.constant 1 : i32
    %52 = arith.cmpi eq, %arg1, %c1_i32_23 : i32
    %true_24 = arith.constant true
    %53 = arith.xori %52, %true_24 : i1
    %54 = vector.broadcast %53 : i1 to vector<10x1x1xi1>
    %55 = arith.ori %51, %54 : vector<10x1x1xi1>
    %56 = arith.andi %49, %55 : vector<10x1x1xi1>
    %57 = vector.broadcast %56 : vector<10x1x1xi1> to vector<10x24x1xi1>
    %58 = vector.broadcast %42 : vector<1x24x1xi1> to vector<10x24x1xi1>
    %59 = arith.andi %57, %58 : vector<10x24x1xi1>
    %60 = arith.extui %59 : vector<10x24x1xi1> to vector<10x24x1xi32>
    %61 = arith.sitofp %60 : vector<10x24x1xi32> to vector<10x24x1xf32>
    %62 = vector.broadcast %61 : vector<10x24x1xf32> to vector<10x24x128xf32>
    %63 = arith.mulf %36, %62 : vector<10x24x128xf32>
    %64 = vector.extract_strided_slice %63 {offsets = [0, 0, 0], sizes = [8, 24, 128], strides = [1, 1, 1]} : vector<10x24x128xf32> to vector<8x24x128xf32>
    %65 = vector.extract_strided_slice %64 {offsets = [0, 0, 0], sizes = [8, 16, 128], strides = [1, 1, 1]} : vector<8x24x128xf32> to vector<8x16x128xf32>
    %66 = vector.extract_strided_slice %64 {offsets = [0, 1, 0], sizes = [8, 16, 128], strides = [1, 1, 1]} : vector<8x24x128xf32> to vector<8x16x128xf32>
    %67 = vector.extract_strided_slice %64 {offsets = [0, 2, 0], sizes = [8, 16, 128], strides = [1, 1, 1]} : vector<8x24x128xf32> to vector<8x16x128xf32>
    %68 = vector.extract_strided_slice %63 {offsets = [1, 0, 0], sizes = [8, 24, 128], strides = [1, 1, 1]} : vector<10x24x128xf32> to vector<8x24x128xf32>
    %69 = vector.extract_strided_slice %68 {offsets = [0, 0, 0], sizes = [8, 16, 128], strides = [1, 1, 1]} : vector<8x24x128xf32> to vector<8x16x128xf32>
    %70 = vector.extract_strided_slice %68 {offsets = [0, 1, 0], sizes = [8, 16, 128], strides = [1, 1, 1]} : vector<8x24x128xf32> to vector<8x16x128xf32>
    %71 = vector.extract_strided_slice %68 {offsets = [0, 2, 0], sizes = [8, 16, 128], strides = [1, 1, 1]} : vector<8x24x128xf32> to vector<8x16x128xf32>
    %72 = vector.extract_strided_slice %63 {offsets = [2, 0, 0], sizes = [8, 24, 128], strides = [1, 1, 1]} : vector<10x24x128xf32> to vector<8x24x128xf32>
    %73 = vector.extract_strided_slice %72 {offsets = [0, 0, 0], sizes = [8, 16, 128], strides = [1, 1, 1]} : vector<8x24x128xf32> to vector<8x16x128xf32>
    %74 = vector.extract_strided_slice %72 {offsets = [0, 1, 0], sizes = [8, 16, 128], strides = [1, 1, 1]} : vector<8x24x128xf32> to vector<8x16x128xf32>
    %75 = vector.extract_strided_slice %72 {offsets = [0, 2, 0], sizes = [8, 16, 128], strides = [1, 1, 1]} : vector<8x24x128xf32> to vector<8x16x128xf32>
    %76 = tpu.concatenate %65, %66, %67, %69, %70, %71, %73, %74, %75 in 2 : vector<8x16x128xf32>, vector<8x16x128xf32>, vector<8x16x128xf32>, vector<8x16x128xf32>, vector<8x16x128xf32>, vector<8x16x128xf32>, vector<8x16x128xf32>, vector<8x16x128xf32>, vector<8x16x128xf32> -> vector<8x16x1152xf32>
    %77 = vector.shape_cast %76 : vector<8x16x1152xf32> to vector<128x1152xf32>
    %c0_25 = arith.constant 0 : index
    %c0_26 = arith.constant 0 : index
    %78 = vector.load %arg5[%c0_25, %c0_26] : memref<1152x128xf32, #tpu.memory_space<vmem>>, vector<1152x128xf32>
    %cst_27 = arith.constant dense<0.000000e+00> : vector<128x128xf32>
    %79 = tpu.matmul %77, %78, %cst_27 {dimension_numbers = #tpu.dot_dimension_numbers<[1], [0], [0], [1], [0, 0, 1, 1], [], []>} : vector<128x1152xf32>, vector<1152x128xf32>, vector<128x128xf32> -> vector<128x128xf32>
    %c0_28 = arith.constant 0 : index
    %c0_29 = arith.constant 0 : index
    %80 = vector.load %arg6[%c0_28, %c0_29] : memref<1x128xf32, #tpu.memory_space<vmem>>, vector<1x128xf32>
    %81 = vector.broadcast %80 : vector<1x128xf32> to vector<128x128xf32>
    %82 = arith.addf %79, %81 : vector<128x128xf32>
    %cst_30 = arith.constant 0.000000e+00 : f32
    %83 = vector.broadcast %cst_30 : f32 to vector<128x128xf32>
    %84 = arith.maximumf %82, %83 : vector<128x128xf32>
    %85 = vector.extract_strided_slice %27 {offsets = [1, 1, 0], sizes = [8, 16, 128], strides = [1, 1, 1]} : vector<10x24x128xf32> to vector<8x16x128xf32>
    %86 = vector.shape_cast %85 : vector<8x16x128xf32> to vector<128x128xf32>
    %c0_31 = arith.constant 0 : index
    %c0_32 = arith.constant 0 : index
    %87 = vector.load %arg7[%c0_31, %c0_32] : memref<128x128xf32, #tpu.memory_space<vmem>>, vector<128x128xf32>
    %cst_33 = arith.constant dense<0.000000e+00> : vector<128x128xf32>
    %88 = tpu.matmul %84, %87, %cst_33 {dimension_numbers = #tpu.dot_dimension_numbers<[1], [0], [0], [1], [0, 0, 1, 1], [], []>} : vector<128x128xf32>, vector<128x128xf32>, vector<128x128xf32> -> vector<128x128xf32>
    %c0_34 = arith.constant 0 : index
    %c0_35 = arith.constant 0 : index
    %89 = vector.load %arg8[%c0_34, %c0_35] : memref<1x128xf32, #tpu.memory_space<vmem>>, vector<1x128xf32>
    %90 = vector.broadcast %89 : vector<1x128xf32> to vector<128x128xf32>
    %91 = arith.addf %88, %90 : vector<128x128xf32>
    %92 = arith.addf %91, %86 : vector<128x128xf32>
    %cst_36 = arith.constant 0.000000e+00 : f32
    %93 = vector.broadcast %cst_36 : f32 to vector<128x128xf32>
    %94 = arith.maximumf %92, %93 : vector<128x128xf32>
    %95 = vector.shape_cast %94 : vector<128x128xf32> to vector<1x8x16x128xf32>
    %c0_37 = arith.constant 0 : index
    %c0_38 = arith.constant 0 : index
    %c0_39 = arith.constant 0 : index
    %c0_40 = arith.constant 0 : index
    %96 = vector.load %arg9[%c0_37, %c0_38, %c0_39, %c0_40] : memref<1x8x16x128xf32, #tpu.memory_space<vmem>>, vector<1x8x16x128xf32>
    tpu.vector_store %arg9[%c0_37, %c0_38, %c0_39, %c0_40], %95 {strides = array<i32>} : memref<1x8x16x128xf32, #tpu.memory_space<vmem>>, vector<1x8x16x128xf32>,
    return
  }
  func.func @transform_1(%arg0: i32, %arg1: i32) -> (i32, i32) {
    %c0_i32 = arith.constant 0 : i32
    %c0_i32_0 = arith.constant 0 : i32
    %c0_i32_1 = arith.constant 0 : i32
    return %c0_i32, %c0_i32_0 : i32, i32
  }
  func.func @transform_2(%arg0: i32, %arg1: i32) -> (i32, i32) {
    %c0_i32 = arith.constant 0 : i32
    %c0_i32_0 = arith.constant 0 : i32
    %c0_i32_1 = arith.constant 0 : i32
    return %c0_i32, %c0_i32_0 : i32, i32
  }
  func.func @transform_3(%arg0: i32, %arg1: i32) -> (i32, i32) {
    %c0_i32 = arith.constant 0 : i32
    %c0_i32_0 = arith.constant 0 : i32
    %c0_i32_1 = arith.constant 0 : i32
    return %c0_i32, %c0_i32_0 : i32, i32
  }
  func.func @transform_4(%arg0: i32, %arg1: i32) -> (i32, i32) {
    %c0_i32 = arith.constant 0 : i32
    %c0_i32_0 = arith.constant 0 : i32
    %c0_i32_1 = arith.constant 0 : i32
    return %c0_i32, %c0_i32_0 : i32, i32
  }
  func.func @transform_5(%arg0: i32, %arg1: i32) -> (i32, i32) {
    %c0_i32 = arith.constant 0 : i32
    %c0_i32_0 = arith.constant 0 : i32
    %c0_i32_1 = arith.constant 0 : i32
    return %c0_i32, %c0_i32_0 : i32, i32
  }
  func.func @transform_6(%arg0: i32, %arg1: i32) -> (i32, i32) {
    %c0_i32 = arith.constant 0 : i32
    %c0_i32_0 = arith.constant 0 : i32
    %c0_i32_1 = arith.constant 0 : i32
    return %c0_i32, %c0_i32_0 : i32, i32
  }
  func.func @transform_7(%arg0: i32, %arg1: i32) -> (i32, i32, i32, i32) {
    %c0_i32 = arith.constant 0 : i32
    %c0_i32_0 = arith.constant 0 : i32
    %c0_i32_1 = arith.constant 0 : i32
    return %arg0, %arg1, %c0_i32, %c0_i32_0 : i32, i32, i32, i32
  }
}

</mosaic_0001>

<llo_original>
// kernel: _lambda_.1
$region0: #{_lambda_.1}
  #allocation0 [shape = 'u32[]', space=smem, size = 0x4, offset = 0x4, fixed_abs, tag = 'smem constant byte address 0x4 - core index']
  #allocation1 [shape = 'u32[72,128]{1,0:T(1,128)}', space=vmem, size = 0x9000, scoped, tag = 'internal scratch']
  #allocation2 [shape = 'f32[2,10,24,128]{3,2,1,0:T(8,128)}', space=vmem, size = 0x3c000, scoped, tag = 'scratch operand']
  #allocation3 [shape = 's32[2]{0}', space=sflag, size = 0x8, scoped, tag = 'scratch operand']
  #allocation4 [shape = 's32[]', space=sflag, size = 0x4, offset = 0, fixed_abs, tag = 'sflag constant byte address 0x0 - dummy sync flag']
  #allocation5 [shape = 's32[]', space=sflag, size = 0x4, offset = 0, fixed_abs, tag = 'sflag constant byte address 0x0 - dummy sync flag']
  %s0 = inlined_call_operand.vmem [shape: f32[36,24,128], index: 0, kind: input, shape index: {}]
  %s1 = inlined_call_operand.vmem [shape: f32[128,128], index: 1, kind: input, shape index: {}]
  %s2 = inlined_call_operand.vmem [shape: f32[1,128], index: 2, kind: input, shape index: {}]
  %s3 = inlined_call_operand.vmem [shape: f32[1152,128], index: 3, kind: input, shape index: {}]
  %s4 = inlined_call_operand.vmem [shape: f32[1,128], index: 4, kind: input, shape index: {}]
  %s5 = inlined_call_operand.vmem [shape: f32[128,128], index: 5, kind: input, shape index: {}]
  %s6 = inlined_call_operand.vmem [shape: f32[1,128], index: 6, kind: input, shape index: {}]
  %s7 = inlined_call_operand.vmem [shape: f32[2,16,16,128], index: 7, kind: output, shape index: {}]
  %s8 = sld [smem:[#allocation0]]
  $region103: #{_lambda_.1} parent=0
    _
  %s10 = ssub.s32 1, %s8
  %s11 = scalar_select 0, %s10, %s8
  loop: start=0, step=1, limit=6
  $region2: #{_lambda_.1} parent=0 // loop_pre_header
    _
  $region3: #{_lambda_.1} parent=0 // loop_header
    %s13 = sphi 0, %s17
    %p14 = scmp.ge.s32.totalorder %s13, 6
    %s20 = sphi 0, %s32
    %s21 = sphi 0, %s28
    %s22 = sphi 0, %s20
    %s23 = sphi 0, %s21
    %s24 = sphi 0, %s22
    %s25 = sphi 0, %s23
    %s33 = sphi 0, %s33
    %s35 = sphi 0, %s33
    %s36 = sphi 0, %s35
    %s50 = sphi 0, %s36
    %s54 = sphi 0, %s54
    %s56 = sphi 0, %s54
    %s57 = sphi 0, %s56
    %s71 = sphi 0, %s57
    %s75 = sphi 0, %s75
    %s77 = sphi 0, %s75
    %s78 = sphi 0, %s77
    %s92 = sphi 0, %s78
    %s96 = sphi 0, %s96
    %s98 = sphi 0, %s96
    %s99 = sphi 0, %s98
    %s113 = sphi 0, %s99
    %s117 = sphi 0, %s117
    %s119 = sphi 0, %s117
    %s120 = sphi 0, %s119
    %s134 = sphi 0, %s120
    %s138 = sphi 0, %s138
    %s140 = sphi 0, %s138
    %s141 = sphi 0, %s140
    %s155 = sphi 0, %s141
    %s163 = sphi 0, %s165
    %s166 = sphi 0, %s163
    %s167 = sphi 0, %s166
    %s183 = sphi 0, %s167
  $region4: #{_lambda_.1} parent=0 // loop_header_branch
    %16 = sbr.rel (%p14) target = $region8
  $region5: #{_lambda_.1} parent=0 // loop_body
    %s18 = ssub.s32 %s13, 1
    %s19 = ssub.s32 %s13, 2
    %s26 = sadd.s32 1, %s21
    %p27 = scmp.ge.s32.totalorder %s26, 2
    %s28 = scalar_select %p27, 0, %s26
    %s29 = sadd.s32 1, %s20
    %s30 = scalar_select %p27, %s29, %s20
    %p31 = scmp.ge.s32.totalorder %s30, 2
    %s32 = scalar_select %p31, 0, %s30
    %s34 = sadd.s32 %s33, 1
    %p37 = scmp.eq.s32.totalorder %s13, 3
    %p38 = scmp.ne.s32.totalorder %s33, %s35
    %p39 = scmp.eq.s32.totalorder %s13, 0
    %p40 = por %p38, %p39
    %p41 = scmp.ne.s32.totalorder %s33, %s35
    %p42 = scmp.eq.s32.totalorder %s18, 3
    %p43 = por %p41, %p42
    %p44 = scmp.ne.s32.totalorder %s35, %s36
    %p45 = scmp.eq.s32.totalorder %s18, 0
    %p46 = por %p44, %p45
    %p47 = scmp.ne.s32.totalorder %s35, %s36
    %p48 = scmp.eq.s32.totalorder %s19, 3
    %p49 = por %p47, %p48
    %p51 = scmp.ne.s32.totalorder %s36, %s50
    %p52 = scmp.eq.s32.totalorder %s19, 0
    %p53 = por %p51, %p52
    %s55 = sadd.s32 %s54, 1
    %p58 = scmp.eq.s32.totalorder %s13, 3
    %p59 = scmp.ne.s32.totalorder %s54, %s56
    %p60 = scmp.eq.s32.totalorder %s13, 0
    %p61 = por %p59, %p60
    %p62 = scmp.ne.s32.totalorder %s54, %s56
    %p63 = scmp.eq.s32.totalorder %s18, 3
    %p64 = por %p62, %p63
    %p65 = scmp.ne.s32.totalorder %s56, %s57
    %p66 = scmp.eq.s32.totalorder %s18, 0
    %p67 = por %p65, %p66
    %p68 = scmp.ne.s32.totalorder %s56, %s57
    %p69 = scmp.eq.s32.totalorder %s19, 3
    %p70 = por %p68, %p69
    %p72 = scmp.ne.s32.totalorder %s57, %s71
    %p73 = scmp.eq.s32.totalorder %s19, 0
    %p74 = por %p72, %p73
    %s76 = sadd.s32 %s75, 1
    %p79 = scmp.eq.s32.totalorder %s13, 3
    %p80 = scmp.ne.s32.totalorder %s75, %s77
    %p81 = scmp.eq.s32.totalorder %s13, 0
    %p82 = por %p80, %p81
    %p83 = scmp.ne.s32.totalorder %s75, %s77
    %p84 = scmp.eq.s32.totalorder %s18, 3
    %p85 = por %p83, %p84
    %p86 = scmp.ne.s32.totalorder %s77, %s78
    %p87 = scmp.eq.s32.totalorder %s18, 0
    %p88 = por %p86, %p87
    %p89 = scmp.ne.s32.totalorder %s77, %s78
    %p90 = scmp.eq.s32.totalorder %s19, 3
    %p91 = por %p89, %p90
    %p93 = scmp.ne.s32.totalorder %s78, %s92
    %p94 = scmp.eq.s32.totalorder %s19, 0
    %p95 = por %p93, %p94
    %s97 = sadd.s32 %s96, 1
    %p100 = scmp.eq.s32.totalorder %s13, 3
    %p101 = scmp.ne.s32.totalorder %s96, %s98
    %p102 = scmp.eq.s32.totalorder %s13, 0
    %p103 = por %p101, %p102
    %p104 = scmp.ne.s32.totalorder %s96, %s98
    %p105 = scmp.eq.s32.totalorder %s18, 3
    %p106 = por %p104, %p105
    %p107 = scmp.ne.s32.totalorder %s98, %s99
    %p108 = scmp.eq.s32.totalorder %s18, 0
    %p109 = por %p107, %p108
    %p110 = scmp.ne.s32.totalorder %s98, %s99
    %p111 = scmp.eq.s32.totalorder %s19, 3
    %p112 = por %p110, %p111
    %p114 = scmp.ne.s32.totalorder %s99, %s113
    %p115 = scmp.eq.s32.totalorder %s19, 0
    %p116 = por %p114, %p115
    %s118 = sadd.s32 %s117, 1
    %p121 = scmp.eq.s32.totalorder %s13, 3
    %p122 = scmp.ne.s32.totalorder %s117, %s119
    %p123 = scmp.eq.s32.totalorder %s13, 0
    %p124 = por %p122, %p123
    %p125 = scmp.ne.s32.totalorder %s117, %s119
    %p126 = scmp.eq.s32.totalorder %s18, 3
    %p127 = por %p125, %p126
    %p128 = scmp.ne.s32.totalorder %s119, %s120
    %p129 = scmp.eq.s32.totalorder %s18, 0
    %p130 = por %p128, %p129
    %p131 = scmp.ne.s32.totalorder %s119, %s120
    %p132 = scmp.eq.s32.totalorder %s19, 3
    %p133 = por %p131, %p132
    %p135 = scmp.ne.s32.totalorder %s120, %s134
    %p136 = scmp.eq.s32.totalorder %s19, 0
    %p137 = por %p135, %p136
    %s139 = sadd.s32 %s138, 1
    %p142 = scmp.eq.s32.totalorder %s13, 3
    %p143 = scmp.ne.s32.totalorder %s138, %s140
    %p144 = scmp.eq.s32.totalorder %s13, 0
    %p145 = por %p143, %p144
    %p146 = scmp.ne.s32.totalorder %s138, %s140
    %p147 = scmp.eq.s32.totalorder %s18, 3
    %p148 = por %p146, %p147
    %p149 = scmp.ne.s32.totalorder %s140, %s141
    %p150 = scmp.eq.s32.totalorder %s18, 0
    %p151 = por %p149, %p150
    %p152 = scmp.ne.s32.totalorder %s140, %s141
    %p153 = scmp.eq.s32.totalorder %s19, 3
    %p154 = por %p152, %p153
    %p156 = scmp.ne.s32.totalorder %s141, %s155
    %p157 = scmp.eq.s32.totalorder %s19, 0
    %p158 = por %p156, %p157
    %s159 = ssub.s32 %s20, %s32
    %s160 = ssub.s32 %s21, %s28
    %s161 = sor.u32 %s159, %s160
    %p162 = scmp.eq.s32.totalorder %s161, 0
    %s164 = sadd.s32 %s163, 1
    %s165 = scalar_select %p162, %s163, %s164
    %p168 = pneg %p162
    %p169 = scmp.eq.s32.totalorder %s13, 3
    %p170 = por %p168, %p169
    %p171 = scmp.ne.s32.totalorder %s163, %s166
    %p172 = scmp.eq.s32.totalorder %s13, 0
    %p173 = por %p171, %p172
    %p174 = scmp.ne.s32.totalorder %s163, %s166
    %p175 = scmp.eq.s32.totalorder %s18, 3
    %p176 = por %p174, %p175
    %p177 = scmp.ne.s32.totalorder %s166, %s167
    %p178 = scmp.eq.s32.totalorder %s18, 0
    %p179 = por %p177, %p178
    %p180 = scmp.ne.s32.totalorder %s166, %s167
    %p181 = scmp.eq.s32.totalorder %s19, 3
    %p182 = por %p180, %p181
    %p184 = scmp.ne.s32.totalorder %s167, %s183
    %p185 = scmp.eq.s32.totalorder %s19, 0
    %p186 = por %p184, %p185
    %p187 = scmp.le.s32.totalorder 1, %s13
    %p188 = scmp.lt.s32.totalorder %s13, 5
    %p189 = pnand %p187, %p188
    %p190 = pneg %p189
    // Predicated region
    $region9: #{_lambda_.1} parent=5 // pred_check
      _
    $region10: #{_lambda_.1} parent=5 // pred_check_branch
      %192 = sbr.rel (%p189) target = $region12
    $region11: #{_lambda_.1} parent=5 // pred_region
      %s193 = ssub.s32 %s13, 1
      // Predicated region
      $region13: #{_lambda_.1} parent=11 // pred_check
        %p194 = pneg %p46
      $region14: #{_lambda_.1} parent=11 // pred_check_branch
        %196 = sbr.rel (%p194) target = $region16
      $region15: #{_lambda_.1} parent=11 // pred_region
        _
      $region16: #{_lambda_.1} parent=11 // pred_fallthru
        _
      // Predicated region
      $region17: #{_lambda_.1} parent=11 // pred_check
        %p197 = pneg %p67
      $region18: #{_lambda_.1} parent=11 // pred_check_branch
        %199 = sbr.rel (%p197) target = $region20
      $region19: #{_lambda_.1} parent=11 // pred_region
        _
      $region20: #{_lambda_.1} parent=11 // pred_fallthru
        _
      // Predicated region
      $region21: #{_lambda_.1} parent=11 // pred_check
        %p200 = pneg %p88
      $region22: #{_lambda_.1} parent=11 // pred_check_branch
        %202 = sbr.rel (%p200) target = $region24
      $region23: #{_lambda_.1} parent=11 // pred_region
        _
      $region24: #{_lambda_.1} parent=11 // pred_fallthru
        _
      // Predicated region
      $region25: #{_lambda_.1} parent=11 // pred_check
        %p203 = pneg %p109
      $region26: #{_lambda_.1} parent=11 // pred_check_branch
        %205 = sbr.rel (%p203) target = $region28
      $region27: #{_lambda_.1} parent=11 // pred_region
        _
      $region28: #{_lambda_.1} parent=11 // pred_fallthru
        _
      // Predicated region
      $region29: #{_lambda_.1} parent=11 // pred_check
        %p206 = pneg %p130
      $region30: #{_lambda_.1} parent=11 // pred_check_branch
        %208 = sbr.rel (%p206) target = $region32
      $region31: #{_lambda_.1} parent=11 // pred_region
        _
      $region32: #{_lambda_.1} parent=11 // pred_fallthru
        _
      // Predicated region
      $region33: #{_lambda_.1} parent=11 // pred_check
        %p209 = pneg %p151
      $region34: #{_lambda_.1} parent=11 // pred_check_branch
        %211 = sbr.rel (%p209) target = $region36
      $region35: #{_lambda_.1} parent=11 // pred_region
        _
      $region36: #{_lambda_.1} parent=11 // pred_fallthru
        _
    $region12: #{_lambda_.1} parent=5 // pred_fallthru
      _
    %p212 = scmp.lt.s32.totalorder %s13, 4
    // Predicated region
    $region37: #{_lambda_.1} parent=5 // pred_check
      %p213 = pneg %p212
    $region38: #{_lambda_.1} parent=5 // pred_check_branch
      %215 = sbr.rel (%p213) target = $region40
    $region39: #{_lambda_.1} parent=5 // pred_region
      _
    $region40: #{_lambda_.1} parent=5 // pred_fallthru
      _
    %p216 = scmp.le.s32.totalorder 1, %s13
    %p217 = scmp.lt.s32.totalorder %s13, 5
    %p218 = pnand %p216, %p217
    %p219 = pneg %p218
    // Predicated region
    $region41: #{_lambda_.1} parent=5 // pred_check
      _
    $region42: #{_lambda_.1} parent=5 // pred_check_branch
      %221 = sbr.rel (%p218) target = $region44
    $region43: #{_lambda_.1} parent=5 // pred_region
      %s222 = ssub.s32 %s13, 1
      %p223 = pneg %p46
      %p224 = pneg %p43
      %p225 = pneg %p67
      %p226 = pneg %p64
      %p227 = pneg %p88
      %p228 = pneg %p85
      %p229 = pneg %p109
      %p230 = pneg %p106
      %p231 = pneg %p130
      %p232 = pneg %p127
      %p233 = pneg %p151
      %p234 = pneg %p148
      %p235 = pneg %p179
      %p236 = pneg %p176
      %s237 = smul.u32 8, %s23
      %p238 = scmp.lt.s32.totalorder %s22, 1
      %s239 = scalar_select %p238, %s22, 1
      %p240 = scmp.lt.s32.totalorder %s237, 15
      %s241 = scalar_select %p240, %s237, 15
      %s242 = smul.addr %s241, 2
      %s243 = smul.addr %s239, 32
      %s244 = sadd.s32 %s242, %s243
      %s245 = smul.addr %s244, 8
      %s246 = scalar_lea.vmem %s7, %s245
      %s247 = smul.u32 8, %s23
      %p248 = scmp.lt.s32.totalorder %s22, 1
      %s249 = scalar_select %p248, %s22, 1
      %p250 = scmp.lt.s32.totalorder %s247, 15
      %s251 = scalar_select %p250, %s247, 15
      %s252 = smul.addr %s251, 2
      %s253 = smul.addr %s249, 32
      %s254 = sadd.s32 %s252, %s253
      %s255 = smul.addr %s254, 8
      %s256 = scalar_lea.vmem %s7, %s255
      %s257 = smul.u32 8, %s23
      %p258 = scmp.eq.s32.totalorder %s23, 0
      // Predicated region
      $region45: #{_lambda_.1} parent=43 // pred_check
        %p259 = pneg %p258
      $region46: #{_lambda_.1} parent=43 // pred_check_branch
        %261 = sbr.rel (%p259) target = $region48
      $region47: #{_lambda_.1} parent=43 // pred_region
        %s262 = smul.u32 %s22, 18
        %s263 = smul.u32 %s262, 24
        %s264 = scalar_lea.vmem %s0, %s263
        // Predicated region
        $region49: #{_lambda_.1} parent=47 // pred_check
          _
        $region50: #{_lambda_.1} parent=47 // pred_check_branch
          %266 = sbr.rel (0) target = $region52
        $region51: #{_lambda_.1} parent=47 // pred_region
          loop: start=0, step=1, limit=1
          $region53: #{_lambda_.1} parent=51 // loop_pre_header
            _
          $region54: #{_lambda_.1} parent=51 // loop_header
            %s268 = sphi 0, %s272
            %p269 = scmp.ge.s32.totalorder %s268, 1
            %s273 = sphi %s264, %s264
            %s274 = sphi [#allocation2], [#allocation2]
          $region55: #{_lambda_.1} parent=51 // loop_header_branch
            %271 = sbr.rel (%p269) target = $region59
          $region56: #{_lambda_.1} parent=51 // loop_body
            %v275 = vld [vmem:[%s273] sm:$0xff]
            %276 = vst [vmem:[%s274] sm:$0xff] %v275
            %v277 = vld [vmem:[%s273 + $0x8] sm:$0xff]
            %278 = vst [vmem:[%s274 + $0x8] sm:$0xff] %v277
            %v279 = vld [vmem:[%s273 + $0x10] sm:$0xff]
            %280 = vst [vmem:[%s274 + $0x10] sm:$0xff] %v279
            %v281 = vld [vmem:[%s273 + $0x18] sm:$0xff]
            %282 = vst [vmem:[%s274 + $0x18] sm:$0xff] %v281
            %v283 = vld [vmem:[%s273 + $0x20] sm:$0xff]
            %284 = vst [vmem:[%s274 + $0x20] sm:$0xff] %v283
            %v285 = vld [vmem:[%s273 + $0x28] sm:$0xff]
            %286 = vst [vmem:[%s274 + $0x28] sm:$0xff] %v285
            %v287 = vld [vmem:[%s273 + $0x30] sm:$0xff]
            %288 = vst [vmem:[%s274 + $0x30] sm:$0xff] %v287
            %v289 = vld [vmem:[%s273 + $0x38] sm:$0xff]
            %290 = vst [vmem:[%s274 + $0x38] sm:$0xff] %v289
            %v291 = vld [vmem:[%s273 + $0x40] sm:$0xff]
            %292 = vst [vmem:[%s274 + $0x40] sm:$0xff] %v291
            %v293 = vld [vmem:[%s273 + $0x48] sm:$0xff]
            %294 = vst [vmem:[%s274 + $0x48] sm:$0xff] %v293
            %v295 = vld [vmem:[%s273 + $0x50] sm:$0xff]
            %296 = vst [vmem:[%s274 + $0x50] sm:$0xff] %v295
            %v297 = vld [vmem:[%s273 + $0x58] sm:$0xff]
            %298 = vst [vmem:[%s274 + $0x58] sm:$0xff] %v297
            %v299 = vld [vmem:[%s273 + $0x60] sm:$0xff]
            %300 = vst [vmem:[%s274 + $0x60] sm:$0xff] %v299
            %v301 = vld [vmem:[%s273 + $0x68] sm:$0xff]
            %302 = vst [vmem:[%s274 + $0x68] sm:$0xff] %v301
            %v303 = vld [vmem:[%s273 + $0x70] sm:$0xff]
            %304 = vst [vmem:[%s274 + $0x70] sm:$0xff] %v303
            %v305 = vld [vmem:[%s273 + $0x78] sm:$0xff]
            %306 = vst [vmem:[%s274 + $0x78] sm:$0xff] %v305
            %v307 = vld [vmem:[%s273 + $0x80] sm:$0xff]
            %308 = vst [vmem:[%s274 + $0x80] sm:$0xff] %v307
            %v309 = vld [vmem:[%s273 + $0x88] sm:$0xff]
            %310 = vst [vmem:[%s274 + $0x88] sm:$0xff] %v309
            %v311 = vld [vmem:[%s273 + $0x90] sm:$0xff]
            %312 = vst [vmem:[%s274 + $0x90] sm:$0xff] %v311
            %v313 = vld [vmem:[%s273 + $0x98] sm:$0xff]
            %314 = vst [vmem:[%s274 + $0x98] sm:$0xff] %v313
            %v315 = vld [vmem:[%s273 + $0xa0] sm:$0xff]
            %316 = vst [vmem:[%s274 + $0xa0] sm:$0xff] %v315
            %v317 = vld [vmem:[%s273 + $0xa8] sm:$0xff]
            %318 = vst [vmem:[%s274 + $0xa8] sm:$0xff] %v317
            %v319 = vld [vmem:[%s273 + $0xb0] sm:$0xff]
            %320 = vst [vmem:[%s274 + $0xb0] sm:$0xff] %v319
            %v321 = vld [vmem:[%s273 + $0xb8] sm:$0xff]
            %322 = vst [vmem:[%s274 + $0xb8] sm:$0xff] %v321
            %v323 = vld [vmem:[%s273 + $0xc0] sm:$0xff]
            %324 = vst [vmem:[%s274 + $0xc0] sm:$0xff] %v323
            %v325 = vld [vmem:[%s273 + $0xc8] sm:$0xff]
            %326 = vst [vmem:[%s274 + $0xc8] sm:$0xff] %v325
            %v327 = vld [vmem:[%s273 + $0xd0] sm:$0xff]
            %328 = vst [vmem:[%s274 + $0xd0] sm:$0xff] %v327
            %v329 = vld [vmem:[%s273 + $0xd8] sm:$0xff]
            %330 = vst [vmem:[%s274 + $0xd8] sm:$0xff] %v329
            %v331 = vld [vmem:[%s273 + $0xe0] sm:$0xff]
            %332 = vst [vmem:[%s274 + $0xe0] sm:$0xff] %v331
            %v333 = vld [vmem:[%s273 + $0xe8] sm:$0xff]
            %334 = vst [vmem:[%s274 + $0xe8] sm:$0xff] %v333
          $region57: #{_lambda_.1} parent=51 // loop_footer
            %s272 = sadd.s32 1, %s268
          $region58: #{_lambda_.1} parent=51 // loop_footer_branch
            %267 = sbr.rel target = $region54
          $region59: #{_lambda_.1} parent=51 // loop_exit
            _
        $region52: #{_lambda_.1} parent=47 // pred_fallthru
          _
        // Predicated region
        $region60: #{_lambda_.1} parent=47 // pred_check
          _
        $region61: #{_lambda_.1} parent=47 // pred_check_branch
          %336 = sbr.rel target = $region63
        $region62: #{_lambda_.1} parent=47 // pred_region
          _
        $region63: #{_lambda_.1} parent=47 // pred_fallthru
          _
        // Predicated region
        $region64: #{_lambda_.1} parent=47 // pred_check
          _
        $region65: #{_lambda_.1} parent=47 // pred_check_branch
          %339 = sbr.rel (0) target = $region67
        $region66: #{_lambda_.1} parent=47 // pred_region
          %340 = vsyncadd [#allocation3], 3840
        $region67: #{_lambda_.1} parent=47 // pred_fallthru
          _
      $region48: #{_lambda_.1} parent=43 // pred_fallthru
        _
      %p341 = scmp.lt.s32.totalorder %s23, 0
      %s342 = ssub.s32 0, %s23
      %s343 = scalar_select %p341, %s342, %s23
      %s344 = sand.u32 %s343, 1
      %s345 = ssub.s32 0, %s344
      %s346 = scalar_select %p341, %s345, %s344
      %p347 = scmp.ne.s32.totalorder %s346, 0
      %p348 = scmp.lt.s32.totalorder %s346, 0
      %p349 = pnand %p348, %p347
      %p350 = pneg %p349
      %s351 = sadd.s32 %s346, 2
      %s352 = scalar_select %p350, %s351, %s346
      %s353 = smul.u32 %s22, 18
      %s354 = smul.u32 %s352, 240
      %s355 = scalar_lea.vmem [#allocation2], %s354
      %s356 = scalar_lea.sflag [#allocation3], %s352
      %s357 = smul.u32 10, 24
      %s358 = smul.u32 %s357, 1
      %s359 = sshll.u32 %s358, 4
      %360 = dma.done %s356, %s359
      %s361 = sadd.s32 %s23, 1
      %p362 = scmp.lt.s32.totalorder %s361, 2
      // Predicated region
      $region68: #{_lambda_.1} parent=43 // pred_check
        %p363 = pneg %p362
      $region69: #{_lambda_.1} parent=43 // pred_check_branch
        %365 = sbr.rel (%p363) target = $region71
      $region70: #{_lambda_.1} parent=43 // pred_region
        %p366 = scmp.lt.s32.totalorder %s361, 0
        %s367 = ssub.s32 0, %s361
        %s368 = scalar_select %p366, %s367, %s361
        %s369 = sand.u32 %s368, 1
        %s370 = ssub.s32 0, %s369
        %s371 = scalar_select %p366, %s370, %s369
        %p372 = scmp.ne.s32.totalorder %s371, 0
        %p373 = scmp.lt.s32.totalorder %s371, 0
        %p374 = pnand %p373, %p372
        %p375 = pneg %p374
        %s376 = sadd.s32 %s371, 2
        %s377 = scalar_select %p375, %s376, %s371
        %s378 = smul.u32 %s361, 8
        %s379 = sadd.s32 %s353, %s378
        %s380 = smul.u32 %s379, 24
        %s381 = scalar_lea.vmem %s0, %s380
        %s382 = smul.u32 %s377, 240
        %s383 = scalar_lea.vmem [#allocation2], %s382
        %s384 = scalar_lea.sflag [#allocation3], %s377
        // Predicated region
        $region72: #{_lambda_.1} parent=70 // pred_check
          _
        $region73: #{_lambda_.1} parent=70 // pred_check_branch
          %386 = sbr.rel (0) target = $region75
        $region74: #{_lambda_.1} parent=70 // pred_region
          loop: start=0, step=1, limit=1
          $region76: #{_lambda_.1} parent=74 // loop_pre_header
            _
          $region77: #{_lambda_.1} parent=74 // loop_header
            %s388 = sphi 0, %s392
            %p389 = scmp.ge.s32.totalorder %s388, 1
            %s393 = sphi %s381, %s381
            %s394 = sphi %s383, %s383
          $region78: #{_lambda_.1} parent=74 // loop_header_branch
            %391 = sbr.rel (%p389) target = $region82
          $region79: #{_lambda_.1} parent=74 // loop_body
            %v395 = vld [vmem:[%s393] sm:$0xff]
            %396 = vst [vmem:[%s394] sm:$0xff] %v395
            %v397 = vld [vmem:[%s393 + $0x8] sm:$0xff]
            %398 = vst [vmem:[%s394 + $0x8] sm:$0xff] %v397
            %v399 = vld [vmem:[%s393 + $0x10] sm:$0xff]
            %400 = vst [vmem:[%s394 + $0x10] sm:$0xff] %v399
            %v401 = vld [vmem:[%s393 + $0x18] sm:$0xff]
            %402 = vst [vmem:[%s394 + $0x18] sm:$0xff] %v401
            %v403 = vld [vmem:[%s393 + $0x20] sm:$0xff]
            %404 = vst [vmem:[%s394 + $0x20] sm:$0xff] %v403
            %v405 = vld [vmem:[%s393 + $0x28] sm:$0xff]
            %406 = vst [vmem:[%s394 + $0x28] sm:$0xff] %v405
            %v407 = vld [vmem:[%s393 + $0x30] sm:$0xff]
            %408 = vst [vmem:[%s394 + $0x30] sm:$0xff] %v407
            %v409 = vld [vmem:[%s393 + $0x38] sm:$0xff]
            %410 = vst [vmem:[%s394 + $0x38] sm:$0xff] %v409
            %v411 = vld [vmem:[%s393 + $0x40] sm:$0xff]
            %412 = vst [vmem:[%s394 + $0x40] sm:$0xff] %v411
            %v413 = vld [vmem:[%s393 + $0x48] sm:$0xff]
            %414 = vst [vmem:[%s394 + $0x48] sm:$0xff] %v413
            %v415 = vld [vmem:[%s393 + $0x50] sm:$0xff]
            %416 = vst [vmem:[%s394 + $0x50] sm:$0xff] %v415
            %v417 = vld [vmem:[%s393 + $0x58] sm:$0xff]
            %418 = vst [vmem:[%s394 + $0x58] sm:$0xff] %v417
            %v419 = vld [vmem:[%s393 + $0x60] sm:$0xff]
            %420 = vst [vmem:[%s394 + $0x60] sm:$0xff] %v419
            %v421 = vld [vmem:[%s393 + $0x68] sm:$0xff]
            %422 = vst [vmem:[%s394 + $0x68] sm:$0xff] %v421
            %v423 = vld [vmem:[%s393 + $0x70] sm:$0xff]
            %424 = vst [vmem:[%s394 + $0x70] sm:$0xff] %v423
            %v425 = vld [vmem:[%s393 + $0x78] sm:$0xff]
            %426 = vst [vmem:[%s394 + $0x78] sm:$0xff] %v425
            %v427 = vld [vmem:[%s393 + $0x80] sm:$0xff]
            %428 = vst [vmem:[%s394 + $0x80] sm:$0xff] %v427
            %v429 = vld [vmem:[%s393 + $0x88] sm:$0xff]
            %430 = vst [vmem:[%s394 + $0x88] sm:$0xff] %v429
            %v431 = vld [vmem:[%s393 + $0x90] sm:$0xff]
            %432 = vst [vmem:[%s394 + $0x90] sm:$0xff] %v431
            %v433 = vld [vmem:[%s393 + $0x98] sm:$0xff]
            %434 = vst [vmem:[%s394 + $0x98] sm:$0xff] %v433
            %v435 = vld [vmem:[%s393 + $0xa0] sm:$0xff]
            %436 = vst [vmem:[%s394 + $0xa0] sm:$0xff] %v435
            %v437 = vld [vmem:[%s393 + $0xa8] sm:$0xff]
            %438 = vst [vmem:[%s394 + $0xa8] sm:$0xff] %v437
            %v439 = vld [vmem:[%s393 + $0xb0] sm:$0xff]
            %440 = vst [vmem:[%s394 + $0xb0] sm:$0xff] %v439
            %v441 = vld [vmem:[%s393 + $0xb8] sm:$0xff]
            %442 = vst [vmem:[%s394 + $0xb8] sm:$0xff] %v441
            %v443 = vld [vmem:[%s393 + $0xc0] sm:$0xff]
            %444 = vst [vmem:[%s394 + $0xc0] sm:$0xff] %v443
            %v445 = vld [vmem:[%s393 + $0xc8] sm:$0xff]
            %446 = vst [vmem:[%s394 + $0xc8] sm:$0xff] %v445
            %v447 = vld [vmem:[%s393 + $0xd0] sm:$0xff]
            %448 = vst [vmem:[%s394 + $0xd0] sm:$0xff] %v447
            %v449 = vld [vmem:[%s393 + $0xd8] sm:$0xff]
            %450 = vst [vmem:[%s394 + $0xd8] sm:$0xff] %v449
            %v451 = vld [vmem:[%s393 + $0xe0] sm:$0xff]
            %452 = vst [vmem:[%s394 + $0xe0] sm:$0xff] %v451
            %v453 = vld [vmem:[%s393 + $0xe8] sm:$0xff]
            %454 = vst [vmem:[%s394 + $0xe8] sm:$0xff] %v453
          $region80: #{_lambda_.1} parent=74 // loop_footer
            %s392 = sadd.s32 1, %s388
          $region81: #{_lambda_.1} parent=74 // loop_footer_branch
            %387 = sbr.rel target = $region77
          $region82: #{_lambda_.1} parent=74 // loop_exit
            _
        $region75: #{_lambda_.1} parent=70 // pred_fallthru
          _
        // Predicated region
        $region83: #{_lambda_.1} parent=70 // pred_check
          _
        $region84: #{_lambda_.1} parent=70 // pred_check_branch
          %456 = sbr.rel target = $region86
        $region85: #{_lambda_.1} parent=70 // pred_region
          _
        $region86: #{_lambda_.1} parent=70 // pred_fallthru
          _
        // Predicated region
        $region87: #{_lambda_.1} parent=70 // pred_check
          _
        $region88: #{_lambda_.1} parent=70 // pred_check_branch
          %459 = sbr.rel (0) target = $region90
        $region89: #{_lambda_.1} parent=70 // pred_region
          %460 = vsyncadd %s384, 3840
        $region90: #{_lambda_.1} parent=70 // pred_fallthru
          _
      $region71: #{_lambda_.1} parent=43 // pred_fallthru
        _
      %v461 = vld [vmem:[%s355] sm:$0xff]
      %v462 = vld [vmem:[%s355 + $0x8] sm:$0xff]
      %v463 = vld [vmem:[%s355 + $0x10] sm:$0xff]
      %v464 = vld [vmem:[%s355 + $0x18] sm:$0xff]
      %v465 = vld [vmem:[%s355 + $0x20] sm:$0xff]
      %v466 = vld [vmem:[%s355 + $0x28] sm:$0xff]
      %v467 = vld [vmem:[%s355 + $0x30] sm:$0xff]
      %v468 = vld [vmem:[%s355 + $0x38] sm:$0xff]
      %v469 = vld [vmem:[%s355 + $0x40] sm:$0xff]
      %v470 = vld [vmem:[%s355 + $0x48] sm:$0xff]
      %v471 = vld [vmem:[%s355 + $0x50] sm:$0xff]
      %v472 = vld [vmem:[%s355 + $0x58] sm:$0xff]
      %v473 = vld [vmem:[%s355 + $0x60] sm:$0xff]
      %v474 = vld [vmem:[%s355 + $0x68] sm:$0xff]
      %v475 = vld [vmem:[%s355 + $0x70] sm:$0xff]
      %v476 = vld [vmem:[%s355 + $0x78] sm:$0xff]
      %v477 = vld [vmem:[%s355 + $0x80] sm:$0xff]
      %v478 = vld [vmem:[%s355 + $0x88] sm:$0xff]
      %v479 = vld [vmem:[%s355 + $0x90] sm:$0xff]
      %v480 = vld [vmem:[%s355 + $0x98] sm:$0xff]
      %v481 = vld [vmem:[%s355 + $0xa0] sm:$0xff]
      %v482 = vld [vmem:[%s355 + $0xa8] sm:$0xff]
      %v483 = vld [vmem:[%s355 + $0xb0] sm:$0xff]
      %v484 = vld [vmem:[%s355 + $0xb8] sm:$0xff]
      %v485 = vld [vmem:[%s355 + $0xc0] sm:$0xff]
      %v486 = vld [vmem:[%s355 + $0xc8] sm:$0xff]
      %v487 = vld [vmem:[%s355 + $0xd0] sm:$0xff]
      %v488 = vld [vmem:[%s355 + $0xd8] sm:$0xff]
      %v489 = vld [vmem:[%s355 + $0xe0] sm:$0xff]
      %v490 = vld [vmem:[%s355 + $0xe8] sm:$0xff]
      %v491 = vld [vmem:[%s1] sm:$0xff]
      %v492 = vld [vmem:[%s1 + $0x8] sm:$0xff]
      %v493 = vld [vmem:[%s1 + $0x10] sm:$0xff]
      %v494 = vld [vmem:[%s1 + $0x18] sm:$0xff]
      %v495 = vld [vmem:[%s1 + $0x20] sm:$0xff]
      %v496 = vld [vmem:[%s1 + $0x28] sm:$0xff]
      %v497 = vld [vmem:[%s1 + $0x30] sm:$0xff]
      %v498 = vld [vmem:[%s1 + $0x38] sm:$0xff]
      %v499 = vld [vmem:[%s1 + $0x40] sm:$0xff]
      %v500 = vld [vmem:[%s1 + $0x48] sm:$0xff]
      %v501 = vld [vmem:[%s1 + $0x50] sm:$0xff]
      %v502 = vld [vmem:[%s1 + $0x58] sm:$0xff]
      %v503 = vld [vmem:[%s1 + $0x60] sm:$0xff]
      %v504 = vld [vmem:[%s1 + $0x68] sm:$0xff]
      %v505 = vld [vmem:[%s1 + $0x70] sm:$0xff]
      %v506 = vld [vmem:[%s1 + $0x78] sm:$0xff]
      %v507 = vld [vmem:[%s2] sm:$0x1]
      %v509 = vperm.slane %v507, 0
      %511 = vmatpush.msra.mxu0 %v506
      %512 = vmatpush.msra.mxu0 %v505
      %513 = vmatpush.msra.mxu0 %v504
      %514 = vmatpush.msra.mxu0 %v503
      %515 = vmatpush.msra.mxu0 %v502
      %516 = vmatpush.msra.mxu0 %v501
      %517 = vmatpush.msra.mxu0 %v500
      %518 = vmatpush.msra.mxu0 %v499
      %519 = vmatpush.msra.mxu0 %v498
      %520 = vmatpush.msra.mxu0 %v497
      %521 = vmatpush.msra.mxu0 %v496
      %522 = vmatpush.msra.mxu0 %v495
      %523 = vmatpush.msra.mxu0 %v494
      %524 = vmatpush.msra.mxu0 %v493
      %525 = vmatpush.msra.mxu0 %v492
      %526 = vmatpush.msra.mxu0 %v491
      %527 = vmatmul.f32.gmra.mxu0 %v461
      %v528 = vpop.f32.mrf.mxu0
      %v529 = vadd.f32 %v509, %v528
      %530 = vmatmul.f32.gmra.mxu0 %v462
      %v531 = vpop.f32.mrf.mxu0
      %v532 = vadd.f32 %v509, %v531
      %533 = vmatmul.f32.gmra.mxu0 %v463
      %v534 = vpop.f32.mrf.mxu0
      %v535 = vadd.f32 %v509, %v534
      %536 = vmatmul.f32.gmra.mxu0 %v464
      %v537 = vpop.f32.mrf.mxu0
      %v538 = vadd.f32 %v509, %v537
      %539 = vmatmul.f32.gmra.mxu0 %v465
      %v540 = vpop.f32.mrf.mxu0
      %v541 = vadd.f32 %v509, %v540
      %542 = vmatmul.f32.gmra.mxu0 %v466
      %v543 = vpop.f32.mrf.mxu0
      %v544 = vadd.f32 %v509, %v543
      %545 = vmatmul.f32.gmra.mxu0 %v467
      %v546 = vpop.f32.mrf.mxu0
      %v547 = vadd.f32 %v509, %v546
      %548 = vmatmul.f32.gmra.mxu0 %v468
      %v549 = vpop.f32.mrf.mxu0
      %v550 = vadd.f32 %v509, %v549
      %551 = vmatmul.f32.gmra.mxu0 %v469
      %v552 = vpop.f32.mrf.mxu0
      %v553 = vadd.f32 %v509, %v552
      %554 = vmatmul.f32.gmra.mxu0 %v470
      %v555 = vpop.f32.mrf.mxu0
      %v556 = vadd.f32 %v509, %v555
      %557 = vmatmul.f32.gmra.mxu0 %v471
      %v558 = vpop.f32.mrf.mxu0
      %v559 = vadd.f32 %v509, %v558
      %560 = vmatmul.f32.gmra.mxu0 %v472
      %v561 = vpop.f32.mrf.mxu0
      %v562 = vadd.f32 %v509, %v561
      %563 = vmatmul.f32.gmra.mxu0 %v473
      %v564 = vpop.f32.mrf.mxu0
      %v565 = vadd.f32 %v509, %v564
      %566 = vmatmul.f32.gmra.mxu0 %v474
      %v567 = vpop.f32.mrf.mxu0
      %v568 = vadd.f32 %v509, %v567
      %569 = vmatmul.f32.gmra.mxu0 %v475
      %v570 = vpop.f32.mrf.mxu0
      %v571 = vadd.f32 %v509, %v570
      %572 = vmatmul.f32.gmra.mxu0 %v476
      %v573 = vpop.f32.mrf.mxu0
      %v574 = vadd.f32 %v509, %v573
      %575 = vmatmul.f32.gmra.mxu0 %v477
      %v576 = vpop.f32.mrf.mxu0
      %v577 = vadd.f32 %v509, %v576
      %578 = vmatmul.f32.gmra.mxu0 %v478
      %v579 = vpop.f32.mrf.mxu0
      %v580 = vadd.f32 %v509, %v579
      %581 = vmatmul.f32.gmra.mxu0 %v479
      %v582 = vpop.f32.mrf.mxu0
      %v583 = vadd.f32 %v509, %v582
      %584 = vmatmul.f32.gmra.mxu0 %v480
      %v585 = vpop.f32.mrf.mxu0
      %v586 = vadd.f32 %v509, %v585
      %587 = vmatmul.f32.gmra.mxu0 %v481
      %v588 = vpop.f32.mrf.mxu0
      %v589 = vadd.f32 %v509, %v588
      %590 = vmatmul.f32.gmra.mxu0 %v482
      %v591 = vpop.f32.mrf.mxu0
      %v592 = vadd.f32 %v509, %v591
      %593 = vmatmul.f32.gmra.mxu0 %v483
      %v594 = vpop.f32.mrf.mxu0
      %v595 = vadd.f32 %v509, %v594
      %596 = vmatmul.f32.gmra.mxu0 %v484
      %v597 = vpop.f32.mrf.mxu0
      %v598 = vadd.f32 %v509, %v597
      %599 = vmatmul.f32.gmra.mxu0 %v485
      %v600 = vpop.f32.mrf.mxu0
      %v601 = vadd.f32 %v509, %v600
      %602 = vmatmul.f32.gmra.mxu0 %v486
      %v603 = vpop.f32.mrf.mxu0
      %v604 = vadd.f32 %v509, %v603
      %605 = vmatmul.f32.gmra.mxu0 %v487
      %v606 = vpop.f32.mrf.mxu0
      %v607 = vadd.f32 %v509, %v606
      %608 = vmatmul.f32.gmra.mxu0 %v488
      %v609 = vpop.f32.mrf.mxu0
      %v610 = vadd.f32 %v509, %v609
      %611 = vmatmul.f32.gmra.mxu0 %v489
      %v612 = vpop.f32.mrf.mxu0
      %v613 = vadd.f32 %v509, %v612
      %614 = vmatmul.f32.gmra.mxu0 %v490
      %v615 = vpop.f32.mrf.mxu0
      %v616 = vadd.f32 %v509, %v615
      %617 = vdwg.mxu0
      %v618 = vmax.f32 %v529, 0.0
      %v619 = vmax.f32 %v532, 0.0
      %v620 = vmax.f32 %v535, 0.0
      %v621 = vmax.f32 %v538, 0.0
      %v622 = vmax.f32 %v541, 0.0
      %v623 = vmax.f32 %v544, 0.0
      %v624 = vmax.f32 %v547, 0.0
      %v625 = vmax.f32 %v550, 0.0
      %v626 = vmax.f32 %v553, 0.0
      %v627 = vmax.f32 %v556, 0.0
      %v628 = vmax.f32 %v559, 0.0
      %v629 = vmax.f32 %v562, 0.0
      %v630 = vmax.f32 %v565, 0.0
      %v631 = vmax.f32 %v568, 0.0
      %v632 = vmax.f32 %v571, 0.0
      %v633 = vmax.f32 %v574, 0.0
      %v634 = vmax.f32 %v577, 0.0
      %v635 = vmax.f32 %v580, 0.0
      %v636 = vmax.f32 %v583, 0.0
      %v637 = vmax.f32 %v586, 0.0
      %v638 = vmax.f32 %v589, 0.0
      %v639 = vmax.f32 %v592, 0.0
      %v640 = vmax.f32 %v595, 0.0
      %v641 = vmax.f32 %v598, 0.0
      %v642 = vmax.f32 %v601, 0.0
      %v643 = vmax.f32 %v604, 0.0
      %v644 = vmax.f32 %v607, 0.0
      %v645 = vmax.f32 %v610, 0.0
      %v646 = vmax.f32 %v613, 0.0
      %v647 = vmax.f32 %v616, 0.0
      %v648 = vlaneseq
      %v649 = vshrl.u32 %v648, 7
      %v650 = vadd.s32 %v649, 8
      %v651 = vadd.s32 %v649, 16
      %vm652 = vcmp.ge.s32.totalorder %v649, 1
      %vm653 = vcmp.ge.s32.totalorder %v650, 1
      %vm654 = vcmp.ge.s32.totalorder %v651, 1
      %vm655 = vcmp.le.s32.totalorder %v649, 16
      %vm656 = vcmp.le.s32.totalorder %v650, 16
      %vm657 = vcmp.le.s32.totalorder %v651, 16
      %vm658 = vmand %vm652, %vm655
      %vm659 = vmand %vm653, %vm656
      %vm660 = vmand %vm654, %vm657
      %p661 = scmp.ne.s32.totalorder %s23, 0
      %s662 = scalar_select %p661, 1, 0
      %v663 = vstv %s662
      %vm664 = vcmp.eq.s32.totalorder %v663, 1
      %p665 = scmp.ne.s32.totalorder %s23, 1
      %s666 = scalar_select %p665, 1, 0
      %v667 = vstv %s666
      %vm668 = vcmp.eq.s32.totalorder %v667, 1
      %v669 = vsel %vm664, 1, 0
      %v670 = vsel %vm668, 1, 0
      %vm671 = vcmp.eq.s32.totalorder %v669, 1
      %vm672 = vcmp.eq.s32.totalorder %v670, 1
      %v673 = vsel %vm658, 1, 0
      %v674 = vsel %vm659, 1, 0
      %v675 = vsel %vm660, 1, 0
      %vm676 = vcmp.eq.s32.totalorder %v673, 1
      %vm677 = vcmp.eq.s32.totalorder %v674, 1
      %vm678 = vcmp.eq.s32.totalorder %v675, 1
      %vm679 = vmand %vm671, %vm676
      %vm680 = vmand %vm671, %vm677
      %vm681 = vmand %vm671, %vm678
      %vm682 = vmand 1, %vm676
      %vm683 = vmand 1, %vm677
      %vm684 = vmand 1, %vm678
      %vm685 = vmand %vm672, %vm676
      %vm686 = vmand %vm672, %vm677
      %vm687 = vmand %vm672, %vm678
      %v688 = vsel %vm679, 1, 0
      %v689 = vsel %vm680, 1, 0
      %v690 = vsel %vm681, 1, 0
      %v691 = vsel %vm682, 1, 0
      %v692 = vsel %vm683, 1, 0
      %v693 = vsel %vm684, 1, 0
      %v694 = vsel %vm685, 1, 0
      %v695 = vsel %vm686, 1, 0
      %v696 = vsel %vm687, 1, 0
      %v697 = vcvt.s32.f32 %v688
      %v698 = vcvt.s32.f32 %v689
      %v699 = vcvt.s32.f32 %v690
      %v700 = vcvt.s32.f32 %v691
      %v701 = vcvt.s32.f32 %v692
      %v702 = vcvt.s32.f32 %v693
      %v703 = vcvt.s32.f32 %v694
      %v704 = vcvt.s32.f32 %v695
      %v705 = vcvt.s32.f32 %v696
      %v706 = vmul.f32 %v618, %v697
      %v707 = vmul.f32 %v619, %v698
      %v708 = vmul.f32 %v620, %v699
      %v709 = vmul.f32 %v621, %v700
      %v710 = vmul.f32 %v622, %v701
      %v711 = vmul.f32 %v623, %v702
      %v712 = vmul.f32 %v624, %v700
      %v713 = vmul.f32 %v625, %v701
      %v714 = vmul.f32 %v626, %v702
      %v715 = vmul.f32 %v627, %v700
      %v716 = vmul.f32 %v628, %v701
      %v717 = vmul.f32 %v629, %v702
      %v718 = vmul.f32 %v630, %v700
      %v719 = vmul.f32 %v631, %v701
      %v720 = vmul.f32 %v632, %v702
      %v721 = vmul.f32 %v633, %v700
      %v722 = vmul.f32 %v634, %v701
      %v723 = vmul.f32 %v635, %v702
      %v724 = vmul.f32 %v636, %v700
      %v725 = vmul.f32 %v637, %v701
      %v726 = vmul.f32 %v638, %v702
      %v727 = vmul.f32 %v639, %v700
      %v728 = vmul.f32 %v640, %v701
      %v729 = vmul.f32 %v641, %v702
      %v730 = vmul.f32 %v642, %v700
      %v731 = vmul.f32 %v643, %v701
      %v732 = vmul.f32 %v644, %v702
      %v733 = vmul.f32 %v645, %v703
      %v734 = vmul.f32 %v646, %v704
      %v735 = vmul.f32 %v647, %v705
      %vm760 = vcmask 1046528
      %v761 = vrot.slane %v706, 1
      %v762 = vrot.slane %v707, 1
      %v763 = vsel %vm760, %v761, %v762
      %v764 = vrot.slane %v708, 1
      %v765 = vsel %vm760, %v762, %v764
      %v766 = vrot.slane %v709, 1
      %v767 = vrot.slane %v710, 1
      %v768 = vsel %vm760, %v766, %v767
      %v769 = vrot.slane %v711, 1
      %v770 = vsel %vm760, %v767, %v769
      %v771 = vrot.slane %v712, 1
      %v772 = vrot.slane %v713, 1
      %v773 = vsel %vm760, %v771, %v772
      %v774 = vrot.slane %v714, 1
      %v775 = vsel %vm760, %v772, %v774
      %v776 = vrot.slane %v715, 1
      %v777 = vrot.slane %v716, 1
      %v778 = vsel %vm760, %v776, %v777
      %v779 = vrot.slane %v717, 1
      %v780 = vsel %vm760, %v777, %v779
      %v781 = vrot.slane %v718, 1
      %v782 = vrot.slane %v719, 1
      %v783 = vsel %vm760, %v781, %v782
      %v784 = vrot.slane %v720, 1
      %v785 = vsel %vm760, %v782, %v784
      %v786 = vrot.slane %v721, 1
      %v787 = vrot.slane %v722, 1
      %v788 = vsel %vm760, %v786, %v787
      %v789 = vrot.slane %v723, 1
      %v790 = vsel %vm760, %v787, %v789
      %v791 = vrot.slane %v724, 1
      %v792 = vrot.slane %v725, 1
      %v793 = vsel %vm760, %v791, %v792
      %v794 = vrot.slane %v726, 1
      %v795 = vsel %vm760, %v792, %v794
      %v796 = vrot.slane %v727, 1
      %v797 = vrot.slane %v728, 1
      %v798 = vsel %vm760, %v796, %v797
      %v799 = vrot.slane %v729, 1
      %v800 = vsel %vm760, %v797, %v799
      %vm817 = vcmask 1045504
      %v818 = vrot.slane %v706, 2
      %v819 = vrot.slane %v707, 2
      %v820 = vsel %vm817, %v818, %v819
      %v821 = vrot.slane %v708, 2
      %v822 = vsel %vm817, %v819, %v821
      %v823 = vrot.slane %v709, 2
      %v824 = vrot.slane %v710, 2
      %v825 = vsel %vm817, %v823, %v824
      %v826 = vrot.slane %v711, 2
      %v827 = vsel %vm817, %v824, %v826
      %v828 = vrot.slane %v712, 2
      %v829 = vrot.slane %v713, 2
      %v830 = vsel %vm817, %v828, %v829
      %v831 = vrot.slane %v714, 2
      %v832 = vsel %vm817, %v829, %v831
      %v833 = vrot.slane %v715, 2
      %v834 = vrot.slane %v716, 2
      %v835 = vsel %vm817, %v833, %v834
      %v836 = vrot.slane %v717, 2
      %v837 = vsel %vm817, %v834, %v836
      %v838 = vrot.slane %v718, 2
      %v839 = vrot.slane %v719, 2
      %v840 = vsel %vm817, %v838, %v839
      %v841 = vrot.slane %v720, 2
      %v842 = vsel %vm817, %v839, %v841
      %v843 = vrot.slane %v721, 2
      %v844 = vrot.slane %v722, 2
      %v845 = vsel %vm817, %v843, %v844
      %v846 = vrot.slane %v723, 2
      %v847 = vsel %vm817, %v844, %v846
      %v848 = vrot.slane %v724, 2
      %v849 = vrot.slane %v725, 2
      %v850 = vsel %vm817, %v848, %v849
      %v851 = vrot.slane %v726, 2
      %v852 = vsel %vm817, %v849, %v851
      %v853 = vrot.slane %v727, 2
      %v854 = vrot.slane %v728, 2
      %v855 = vsel %vm817, %v853, %v854
      %v856 = vrot.slane %v729, 2
      %v857 = vsel %vm817, %v854, %v856
      %v877 = vrot.slane %v730, 1
      %v878 = vrot.slane %v731, 1
      %v879 = vsel %vm760, %v877, %v878
      %v880 = vrot.slane %v732, 1
      %v881 = vsel %vm760, %v878, %v880
      %v884 = vrot.slane %v730, 2
      %v885 = vrot.slane %v731, 2
      %v886 = vsel %vm817, %v884, %v885
      %v887 = vrot.slane %v732, 2
      %v888 = vsel %vm817, %v885, %v887
      %v894 = vrot.slane %v733, 1
      %v895 = vrot.slane %v734, 1
      %v896 = vsel %vm760, %v894, %v895
      %v897 = vrot.slane %v735, 1
      %v898 = vsel %vm760, %v895, %v897
      %v901 = vrot.slane %v733, 2
      %v902 = vrot.slane %v734, 2
      %v903 = vsel %vm817, %v901, %v902
      %v904 = vrot.slane %v735, 2
      %v905 = vsel %vm817, %v902, %v904
      %v908 = vld [vmem:[%s3] sm:$0xff]
      %v909 = vld [vmem:[%s3 + $0x8] sm:$0xff]
      %v910 = vld [vmem:[%s3 + $0x10] sm:$0xff]
      %v911 = vld [vmem:[%s3 + $0x18] sm:$0xff]
      %v912 = vld [vmem:[%s3 + $0x20] sm:$0xff]
      %v913 = vld [vmem:[%s3 + $0x28] sm:$0xff]
      %v914 = vld [vmem:[%s3 + $0x30] sm:$0xff]
      %v915 = vld [vmem:[%s3 + $0x38] sm:$0xff]
      %v916 = vld [vmem:[%s3 + $0x40] sm:$0xff]
      %v917 = vld [vmem:[%s3 + $0x48] sm:$0xff]
      %v918 = vld [vmem:[%s3 + $0x50] sm:$0xff]
      %v919 = vld [vmem:[%s3 + $0x58] sm:$0xff]
      %v920 = vld [vmem:[%s3 + $0x60] sm:$0xff]
      %v921 = vld [vmem:[%s3 + $0x68] sm:$0xff]
      %v922 = vld [vmem:[%s3 + $0x70] sm:$0xff]
      %v923 = vld [vmem:[%s3 + $0x78] sm:$0xff]
      %v924 = vld [vmem:[%s3 + $0x80] sm:$0xff]
      %v925 = vld [vmem:[%s3 + $0x88] sm:$0xff]
      %v926 = vld [vmem:[%s3 + $0x90] sm:$0xff]
      %v927 = vld [vmem:[%s3 + $0x98] sm:$0xff]
      %v928 = vld [vmem:[%s3 + $0xa0] sm:$0xff]
      %v929 = vld [vmem:[%s3 + $0xa8] sm:$0xff]
      %v930 = vld [vmem:[%s3 + $0xb0] sm:$0xff]
      %v931 = vld [vmem:[%s3 + $0xb8] sm:$0xff]
      %v932 = vld [vmem:[%s3 + $0xc0] sm:$0xff]
      %v933 = vld [vmem:[%s3 + $0xc8] sm:$0xff]
      %v934 = vld [vmem:[%s3 + $0xd0] sm:$0xff]
      %v935 = vld [vmem:[%s3 + $0xd8] sm:$0xff]
      %v936 = vld [vmem:[%s3 + $0xe0] sm:$0xff]
      %v937 = vld [vmem:[%s3 + $0xe8] sm:$0xff]
      %v938 = vld [vmem:[%s3 + $0xf0] sm:$0xff]
      %v939 = vld [vmem:[%s3 + $0xf8] sm:$0xff]
      %v940 = vld [vmem:[%s3 + $0x100] sm:$0xff]
      %v941 = vld [vmem:[%s3 + $0x108] sm:$0xff]
      %v942 = vld [vmem:[%s3 + $0x110] sm:$0xff]
      %v943 = vld [vmem:[%s3 + $0x118] sm:$0xff]
      %v944 = vld [vmem:[%s3 + $0x120] sm:$0xff]
      %v945 = vld [vmem:[%s3 + $0x128] sm:$0xff]
      %v946 = vld [vmem:[%s3 + $0x130] sm:$0xff]
      %v947 = vld [vmem:[%s3 + $0x138] sm:$0xff]
      %v948 = vld [vmem:[%s3 + $0x140] sm:$0xff]
      %v949 = vld [vmem:[%s3 + $0x148] sm:$0xff]
      %v950 = vld [vmem:[%s3 + $0x150] sm:$0xff]
      %v951 = vld [vmem:[%s3 + $0x158] sm:$0xff]
      %v952 = vld [vmem:[%s3 + $0x160] sm:$0xff]
      %v953 = vld [vmem:[%s3 + $0x168] sm:$0xff]
      %v954 = vld [vmem:[%s3 + $0x170] sm:$0xff]
      %v955 = vld [vmem:[%s3 + $0x178] sm:$0xff]
      %v956 = vld [vmem:[%s3 + $0x180] sm:$0xff]
      %v957 = vld [vmem:[%s3 + $0x188] sm:$0xff]
      %v958 = vld [vmem:[%s3 + $0x190] sm:$0xff]
      %v959 = vld [vmem:[%s3 + $0x198] sm:$0xff]
      %v960 = vld [vmem:[%s3 + $0x1a0] sm:$0xff]
      %v961 = vld [vmem:[%s3 + $0x1a8] sm:$0xff]
      %v962 = vld [vmem:[%s3 + $0x1b0] sm:$0xff]
      %v963 = vld [vmem:[%s3 + $0x1b8] sm:$0xff]
      %v964 = vld [vmem:[%s3 + $0x1c0] sm:$0xff]
      %v965 = vld [vmem:[%s3 + $0x1c8] sm:$0xff]
      %v966 = vld [vmem:[%s3 + $0x1d0] sm:$0xff]
      %v967 = vld [vmem:[%s3 + $0x1d8] sm:$0xff]
      %v968 = vld [vmem:[%s3 + $0x1e0] sm:$0xff]
      %v969 = vld [vmem:[%s3 + $0x1e8] sm:$0xff]
      %v970 = vld [vmem:[%s3 + $0x1f0] sm:$0xff]
      %v971 = vld [vmem:[%s3 + $0x1f8] sm:$0xff]
      %v972 = vld [vmem:[%s3 + $0x200] sm:$0xff]
      %v973 = vld [vmem:[%s3 + $0x208] sm:$0xff]
      %v974 = vld [vmem:[%s3 + $0x210] sm:$0xff]
      %v975 = vld [vmem:[%s3 + $0x218] sm:$0xff]
      %v976 = vld [vmem:[%s3 + $0x220] sm:$0xff]
      %v977 = vld [vmem:[%s3 + $0x228] sm:$0xff]
      %v978 = vld [vmem:[%s3 + $0x230] sm:$0xff]
      %v979 = vld [vmem:[%s3 + $0x238] sm:$0xff]
      %v980 = vld [vmem:[%s3 + $0x240] sm:$0xff]
      %v981 = vld [vmem:[%s3 + $0x248] sm:$0xff]
      %v982 = vld [vmem:[%s3 + $0x250] sm:$0xff]
      %v983 = vld [vmem:[%s3 + $0x258] sm:$0xff]
      %v984 = vld [vmem:[%s3 + $0x260] sm:$0xff]
      %v985 = vld [vmem:[%s3 + $0x268] sm:$0xff]
      %v986 = vld [vmem:[%s3 + $0x270] sm:$0xff]
      %v987 = vld [vmem:[%s3 + $0x278] sm:$0xff]
      %v988 = vld [vmem:[%s3 + $0x280] sm:$0xff]
      %v989 = vld [vmem:[%s3 + $0x288] sm:$0xff]
      %v990 = vld [vmem:[%s3 + $0x290] sm:$0xff]
      %v991 = vld [vmem:[%s3 + $0x298] sm:$0xff]
      %v992 = vld [vmem:[%s3 + $0x2a0] sm:$0xff]
      %v993 = vld [vmem:[%s3 + $0x2a8] sm:$0xff]
      %v994 = vld [vmem:[%s3 + $0x2b0] sm:$0xff]
      %v995 = vld [vmem:[%s3 + $0x2b8] sm:$0xff]
      %v996 = vld [vmem:[%s3 + $0x2c0] sm:$0xff]
      %v997 = vld [vmem:[%s3 + $0x2c8] sm:$0xff]
      %v998 = vld [vmem:[%s3 + $0x2d0] sm:$0xff]
      %v999 = vld [vmem:[%s3 + $0x2d8] sm:$0xff]
      %v1000 = vld [vmem:[%s3 + $0x2e0] sm:$0xff]
      %v1001 = vld [vmem:[%s3 + $0x2e8] sm:$0xff]
      %v1002 = vld [vmem:[%s3 + $0x2f0] sm:$0xff]
      %v1003 = vld [vmem:[%s3 + $0x2f8] sm:$0xff]
      %v1004 = vld [vmem:[%s3 + $0x300] sm:$0xff]
      %v1005 = vld [vmem:[%s3 + $0x308] sm:$0xff]
      %v1006 = vld [vmem:[%s3 + $0x310] sm:$0xff]
      %v1007 = vld [vmem:[%s3 + $0x318] sm:$0xff]
      %v1008 = vld [vmem:[%s3 + $0x320] sm:$0xff]
      %v1009 = vld [vmem:[%s3 + $0x328] sm:$0xff]
      %v1010 = vld [vmem:[%s3 + $0x330] sm:$0xff]
      %v1011 = vld [vmem:[%s3 + $0x338] sm:$0xff]
      %v1012 = vld [vmem:[%s3 + $0x340] sm:$0xff]
      %v1013 = vld [vmem:[%s3 + $0x348] sm:$0xff]
      %v1014 = vld [vmem:[%s3 + $0x350] sm:$0xff]
      %v1015 = vld [vmem:[%s3 + $0x358] sm:$0xff]
      %v1016 = vld [vmem:[%s3 + $0x360] sm:$0xff]
      %v1017 = vld [vmem:[%s3 + $0x368] sm:$0xff]
      %v1018 = vld [vmem:[%s3 + $0x370] sm:$0xff]
      %v1019 = vld [vmem:[%s3 + $0x378] sm:$0xff]
      %v1020 = vld [vmem:[%s3 + $0x380] sm:$0xff]
      %v1021 = vld [vmem:[%s3 + $0x388] sm:$0xff]
      %v1022 = vld [vmem:[%s3 + $0x390] sm:$0xff]
      %v1023 = vld [vmem:[%s3 + $0x398] sm:$0xff]
      %v1024 = vld [vmem:[%s3 + $0x3a0] sm:$0xff]
      %v1025 = vld [vmem:[%s3 + $0x3a8] sm:$0xff]
      %v1026 = vld [vmem:[%s3 + $0x3b0] sm:$0xff]
      %v1027 = vld [vmem:[%s3 + $0x3b8] sm:$0xff]
      %v1028 = vld [vmem:[%s3 + $0x3c0] sm:$0xff]
      %v1029 = vld [vmem:[%s3 + $0x3c8] sm:$0xff]
      %v1030 = vld [vmem:[%s3 + $0x3d0] sm:$0xff]
      %v1031 = vld [vmem:[%s3 + $0x3d8] sm:$0xff]
      %v1032 = vld [vmem:[%s3 + $0x3e0] sm:$0xff]
      %v1033 = vld [vmem:[%s3 + $0x3e8] sm:$0xff]
      %v1034 = vld [vmem:[%s3 + $0x3f0] sm:$0xff]
      %v1035 = vld [vmem:[%s3 + $0x3f8] sm:$0xff]
      %v1036 = vld [vmem:[%s3 + $0x400] sm:$0xff]
      %v1037 = vld [vmem:[%s3 + $0x408] sm:$0xff]
      %v1038 = vld [vmem:[%s3 + $0x410] sm:$0xff]
      %v1039 = vld [vmem:[%s3 + $0x418] sm:$0xff]
      %v1040 = vld [vmem:[%s3 + $0x420] sm:$0xff]
      %v1041 = vld [vmem:[%s3 + $0x428] sm:$0xff]
      %v1042 = vld [vmem:[%s3 + $0x430] sm:$0xff]
      %v1043 = vld [vmem:[%s3 + $0x438] sm:$0xff]
      %v1044 = vld [vmem:[%s3 + $0x440] sm:$0xff]
      %v1045 = vld [vmem:[%s3 + $0x448] sm:$0xff]
      %v1046 = vld [vmem:[%s3 + $0x450] sm:$0xff]
      %v1047 = vld [vmem:[%s3 + $0x458] sm:$0xff]
      %v1048 = vld [vmem:[%s3 + $0x460] sm:$0xff]
      %v1049 = vld [vmem:[%s3 + $0x468] sm:$0xff]
      %v1050 = vld [vmem:[%s3 + $0x470] sm:$0xff]
      %v1051 = vld [vmem:[%s3 + $0x478] sm:$0xff]
      %v1052 = vld [vmem:[%s4] sm:$0x1]
      %v1054 = vperm.slane %v1052, 0
      %1056 = vmatpush.msra.mxu0 %v923
      %1057 = vmatpush.msra.mxu0 %v922
      %1058 = vmatpush.msra.mxu0 %v921
      %1059 = vmatpush.msra.mxu0 %v920
      %1060 = vmatpush.msra.mxu0 %v919
      %1061 = vmatpush.msra.mxu0 %v918
      %1062 = vmatpush.msra.mxu0 %v917
      %1063 = vmatpush.msra.mxu0 %v916
      %1064 = vmatpush.msra.mxu0 %v915
      %1065 = vmatpush.msra.mxu0 %v914
      %1066 = vmatpush.msra.mxu0 %v913
      %1067 = vmatpush.msra.mxu0 %v912
      %1068 = vmatpush.msra.mxu0 %v911
      %1069 = vmatpush.msra.mxu0 %v910
      %1070 = vmatpush.msra.mxu0 %v909
      %1071 = vmatpush.msra.mxu0 %v908
      %1072 = vmatmul.f32.gmra.mxu0 %v706
      %v1073 = vpop.f32.mrf.mxu0
      %v1074 = vadd.f32 %v1054, %v1073
      %1075 = vmatmul.f32.gmra.mxu0 %v707
      %v1076 = vpop.f32.mrf.mxu0
      %v1077 = vadd.f32 %v1054, %v1076
      %1078 = vmatmul.f32.gmra.mxu0 %v709
      %v1079 = vpop.f32.mrf.mxu0
      %v1080 = vadd.f32 %v1054, %v1079
      %1081 = vmatmul.f32.gmra.mxu0 %v710
      %v1082 = vpop.f32.mrf.mxu0
      %v1083 = vadd.f32 %v1054, %v1082
      %1084 = vmatmul.f32.gmra.mxu0 %v712
      %v1085 = vpop.f32.mrf.mxu0
      %v1086 = vadd.f32 %v1054, %v1085
      %1087 = vmatmul.f32.gmra.mxu0 %v713
      %v1088 = vpop.f32.mrf.mxu0
      %v1089 = vadd.f32 %v1054, %v1088
      %1090 = vmatmul.f32.gmra.mxu0 %v715
      %v1091 = vpop.f32.mrf.mxu0
      %v1092 = vadd.f32 %v1054, %v1091
      %1093 = vmatmul.f32.gmra.mxu0 %v716
      %v1094 = vpop.f32.mrf.mxu0
      %v1095 = vadd.f32 %v1054, %v1094
      %1096 = vmatmul.f32.gmra.mxu0 %v718
      %v1097 = vpop.f32.mrf.mxu0
      %v1098 = vadd.f32 %v1054, %v1097
      %1099 = vmatmul.f32.gmra.mxu0 %v719
      %v1100 = vpop.f32.mrf.mxu0
      %v1101 = vadd.f32 %v1054, %v1100
      %1102 = vmatmul.f32.gmra.mxu0 %v721
      %v1103 = vpop.f32.mrf.mxu0
      %v1104 = vadd.f32 %v1054, %v1103
      %1105 = vmatmul.f32.gmra.mxu0 %v722
      %v1106 = vpop.f32.mrf.mxu0
      %v1107 = vadd.f32 %v1054, %v1106
      %1108 = vmatmul.f32.gmra.mxu0 %v724
      %v1109 = vpop.f32.mrf.mxu0
      %v1110 = vadd.f32 %v1054, %v1109
      %1111 = vmatmul.f32.gmra.mxu0 %v725
      %v1112 = vpop.f32.mrf.mxu0
      %v1113 = vadd.f32 %v1054, %v1112
      %1114 = vmatmul.f32.gmra.mxu0 %v727
      %v1115 = vpop.f32.mrf.mxu0
      %v1116 = vadd.f32 %v1054, %v1115
      %1117 = vmatmul.f32.gmra.mxu0 %v728
      %v1118 = vpop.f32.mrf.mxu0
      %v1119 = vadd.f32 %v1054, %v1118
      %1120 = vdwg.mxu0
      %1121 = vmatpush.msra.mxu0 %v939
      %1122 = vmatpush.msra.mxu0 %v938
      %1123 = vmatpush.msra.mxu0 %v937
      %1124 = vmatpush.msra.mxu0 %v936
      %1125 = vmatpush.msra.mxu0 %v935
      %1126 = vmatpush.msra.mxu0 %v934
      %1127 = vmatpush.msra.mxu0 %v933
      %1128 = vmatpush.msra.mxu0 %v932
      %1129 = vmatpush.msra.mxu0 %v931
      %1130 = vmatpush.msra.mxu0 %v930
      %1131 = vmatpush.msra.mxu0 %v929
      %1132 = vmatpush.msra.mxu0 %v928
      %1133 = vmatpush.msra.mxu0 %v927
      %1134 = vmatpush.msra.mxu0 %v926
      %1135 = vmatpush.msra.mxu0 %v925
      %1136 = vmatpush.msra.mxu0 %v924
      %1137 = vmatmul.f32.gmra.mxu0 %v763
      %v1138 = vpop.f32.mrf.mxu0
      %v1139 = vadd.f32 %v1074, %v1138
      %1140 = vmatmul.f32.gmra.mxu0 %v765
      %v1141 = vpop.f32.mrf.mxu0
      %v1142 = vadd.f32 %v1077, %v1141
      %1143 = vmatmul.f32.gmra.mxu0 %v768
      %v1144 = vpop.f32.mrf.mxu0
      %v1145 = vadd.f32 %v1080, %v1144
      %1146 = vmatmul.f32.gmra.mxu0 %v770
      %v1147 = vpop.f32.mrf.mxu0
      %v1148 = vadd.f32 %v1083, %v1147
      %1149 = vmatmul.f32.gmra.mxu0 %v773
      %v1150 = vpop.f32.mrf.mxu0
      %v1151 = vadd.f32 %v1086, %v1150
      %1152 = vmatmul.f32.gmra.mxu0 %v775
      %v1153 = vpop.f32.mrf.mxu0
      %v1154 = vadd.f32 %v1089, %v1153
      %1155 = vmatmul.f32.gmra.mxu0 %v778
      %v1156 = vpop.f32.mrf.mxu0
      %v1157 = vadd.f32 %v1092, %v1156
      %1158 = vmatmul.f32.gmra.mxu0 %v780
      %v1159 = vpop.f32.mrf.mxu0
      %v1160 = vadd.f32 %v1095, %v1159
      %1161 = vmatmul.f32.gmra.mxu0 %v783
      %v1162 = vpop.f32.mrf.mxu0
      %v1163 = vadd.f32 %v1098, %v1162
      %1164 = vmatmul.f32.gmra.mxu0 %v785
      %v1165 = vpop.f32.mrf.mxu0
      %v1166 = vadd.f32 %v1101, %v1165
      %1167 = vmatmul.f32.gmra.mxu0 %v788
      %v1168 = vpop.f32.mrf.mxu0
      %v1169 = vadd.f32 %v1104, %v1168
      %1170 = vmatmul.f32.gmra.mxu0 %v790
      %v1171 = vpop.f32.mrf.mxu0
      %v1172 = vadd.f32 %v1107, %v1171
      %1173 = vmatmul.f32.gmra.mxu0 %v793
      %v1174 = vpop.f32.mrf.mxu0
      %v1175 = vadd.f32 %v1110, %v1174
      %1176 = vmatmul.f32.gmra.mxu0 %v795
      %v1177 = vpop.f32.mrf.mxu0
      %v1178 = vadd.f32 %v1113, %v1177
      %1179 = vmatmul.f32.gmra.mxu0 %v798
      %v1180 = vpop.f32.mrf.mxu0
      %v1181 = vadd.f32 %v1116, %v1180
      %1182 = vmatmul.f32.gmra.mxu0 %v800
      %v1183 = vpop.f32.mrf.mxu0
      %v1184 = vadd.f32 %v1119, %v1183
      %1185 = vdwg.mxu0
      %1186 = vmatpush.msra.mxu0 %v955
      %1187 = vmatpush.msra.mxu0 %v954
      %1188 = vmatpush.msra.mxu0 %v953
      %1189 = vmatpush.msra.mxu0 %v952
      %1190 = vmatpush.msra.mxu0 %v951
      %1191 = vmatpush.msra.mxu0 %v950
      %1192 = vmatpush.msra.mxu0 %v949
      %1193 = vmatpush.msra.mxu0 %v948
      %1194 = vmatpush.msra.mxu0 %v947
      %1195 = vmatpush.msra.mxu0 %v946
      %1196 = vmatpush.msra.mxu0 %v945
      %1197 = vmatpush.msra.mxu0 %v944
      %1198 = vmatpush.msra.mxu0 %v943
      %1199 = vmatpush.msra.mxu0 %v942
      %1200 = vmatpush.msra.mxu0 %v941
      %1201 = vmatpush.msra.mxu0 %v940
      %1202 = vmatmul.f32.gmra.mxu0 %v820
      %v1203 = vpop.f32.mrf.mxu0
      %v1204 = vadd.f32 %v1139, %v1203
      %1205 = vmatmul.f32.gmra.mxu0 %v822
      %v1206 = vpop.f32.mrf.mxu0
      %v1207 = vadd.f32 %v1142, %v1206
      %1208 = vmatmul.f32.gmra.mxu0 %v825
      %v1209 = vpop.f32.mrf.mxu0
      %v1210 = vadd.f32 %v1145, %v1209
      %1211 = vmatmul.f32.gmra.mxu0 %v827
      %v1212 = vpop.f32.mrf.mxu0
      %v1213 = vadd.f32 %v1148, %v1212
      %1214 = vmatmul.f32.gmra.mxu0 %v830
      %v1215 = vpop.f32.mrf.mxu0
      %v1216 = vadd.f32 %v1151, %v1215
      %1217 = vmatmul.f32.gmra.mxu0 %v832
      %v1218 = vpop.f32.mrf.mxu0
      %v1219 = vadd.f32 %v1154, %v1218
      %1220 = vmatmul.f32.gmra.mxu0 %v835
      %v1221 = vpop.f32.mrf.mxu0
      %v1222 = vadd.f32 %v1157, %v1221
      %1223 = vmatmul.f32.gmra.mxu0 %v837
      %v1224 = vpop.f32.mrf.mxu0
      %v1225 = vadd.f32 %v1160, %v1224
      %1226 = vmatmul.f32.gmra.mxu0 %v840
      %v1227 = vpop.f32.mrf.mxu0
      %v1228 = vadd.f32 %v1163, %v1227
      %1229 = vmatmul.f32.gmra.mxu0 %v842
      %v1230 = vpop.f32.mrf.mxu0
      %v1231 = vadd.f32 %v1166, %v1230
      %1232 = vmatmul.f32.gmra.mxu0 %v845
      %v1233 = vpop.f32.mrf.mxu0
      %v1234 = vadd.f32 %v1169, %v1233
      %1235 = vmatmul.f32.gmra.mxu0 %v847
      %v1236 = vpop.f32.mrf.mxu0
      %v1237 = vadd.f32 %v1172, %v1236
      %1238 = vmatmul.f32.gmra.mxu0 %v850
      %v1239 = vpop.f32.mrf.mxu0
      %v1240 = vadd.f32 %v1175, %v1239
      %1241 = vmatmul.f32.gmra.mxu0 %v852
      %v1242 = vpop.f32.mrf.mxu0
      %v1243 = vadd.f32 %v1178, %v1242
      %1244 = vmatmul.f32.gmra.mxu0 %v855
      %v1245 = vpop.f32.mrf.mxu0
      %v1246 = vadd.f32 %v1181, %v1245
      %1247 = vmatmul.f32.gmra.mxu0 %v857
      %v1248 = vpop.f32.mrf.mxu0
      %v1249 = vadd.f32 %v1184, %v1248
      %1250 = vdwg.mxu0
      %1251 = vmatpush.msra.mxu0 %v971
      %1252 = vmatpush.msra.mxu0 %v970
      %1253 = vmatpush.msra.mxu0 %v969
      %1254 = vmatpush.msra.mxu0 %v968
      %1255 = vmatpush.msra.mxu0 %v967
      %1256 = vmatpush.msra.mxu0 %v966
      %1257 = vmatpush.msra.mxu0 %v965
      %1258 = vmatpush.msra.mxu0 %v964
      %1259 = vmatpush.msra.mxu0 %v963
      %1260 = vmatpush.msra.mxu0 %v962
      %1261 = vmatpush.msra.mxu0 %v961
      %1262 = vmatpush.msra.mxu0 %v960
      %1263 = vmatpush.msra.mxu0 %v959
      %1264 = vmatpush.msra.mxu0 %v958
      %1265 = vmatpush.msra.mxu0 %v957
      %1266 = vmatpush.msra.mxu0 %v956
      %1267 = vmatmul.f32.gmra.mxu0 %v709
      %v1268 = vpop.f32.mrf.mxu0
      %v1269 = vadd.f32 %v1204, %v1268
      %1270 = vmatmul.f32.gmra.mxu0 %v710
      %v1271 = vpop.f32.mrf.mxu0
      %v1272 = vadd.f32 %v1207, %v1271
      %1273 = vmatmul.f32.gmra.mxu0 %v712
      %v1274 = vpop.f32.mrf.mxu0
      %v1275 = vadd.f32 %v1210, %v1274
      %1276 = vmatmul.f32.gmra.mxu0 %v713
      %v1277 = vpop.f32.mrf.mxu0
      %v1278 = vadd.f32 %v1213, %v1277
      %1279 = vmatmul.f32.gmra.mxu0 %v715
      %v1280 = vpop.f32.mrf.mxu0
      %v1281 = vadd.f32 %v1216, %v1280
      %1282 = vmatmul.f32.gmra.mxu0 %v716
      %v1283 = vpop.f32.mrf.mxu0
      %v1284 = vadd.f32 %v1219, %v1283
      %1285 = vmatmul.f32.gmra.mxu0 %v718
      %v1286 = vpop.f32.mrf.mxu0
      %v1287 = vadd.f32 %v1222, %v1286
      %1288 = vmatmul.f32.gmra.mxu0 %v719
      %v1289 = vpop.f32.mrf.mxu0
      %v1290 = vadd.f32 %v1225, %v1289
      %1291 = vmatmul.f32.gmra.mxu0 %v721
      %v1292 = vpop.f32.mrf.mxu0
      %v1293 = vadd.f32 %v1228, %v1292
      %1294 = vmatmul.f32.gmra.mxu0 %v722
      %v1295 = vpop.f32.mrf.mxu0
      %v1296 = vadd.f32 %v1231, %v1295
      %1297 = vmatmul.f32.gmra.mxu0 %v724
      %v1298 = vpop.f32.mrf.mxu0
      %v1299 = vadd.f32 %v1234, %v1298
      %1300 = vmatmul.f32.gmra.mxu0 %v725
      %v1301 = vpop.f32.mrf.mxu0
      %v1302 = vadd.f32 %v1237, %v1301
      %1303 = vmatmul.f32.gmra.mxu0 %v727
      %v1304 = vpop.f32.mrf.mxu0
      %v1305 = vadd.f32 %v1240, %v1304
      %1306 = vmatmul.f32.gmra.mxu0 %v728
      %v1307 = vpop.f32.mrf.mxu0
      %v1308 = vadd.f32 %v1243, %v1307
      %1309 = vmatmul.f32.gmra.mxu0 %v730
      %v1310 = vpop.f32.mrf.mxu0
      %v1311 = vadd.f32 %v1246, %v1310
      %1312 = vmatmul.f32.gmra.mxu0 %v731
      %v1313 = vpop.f32.mrf.mxu0
      %v1314 = vadd.f32 %v1249, %v1313
      %1315 = vdwg.mxu0
      %1316 = vmatpush.msra.mxu0 %v987
      %1317 = vmatpush.msra.mxu0 %v986
      %1318 = vmatpush.msra.mxu0 %v985
      %1319 = vmatpush.msra.mxu0 %v984
      %1320 = vmatpush.msra.mxu0 %v983
      %1321 = vmatpush.msra.mxu0 %v982
      %1322 = vmatpush.msra.mxu0 %v981
      %1323 = vmatpush.msra.mxu0 %v980
      %1324 = vmatpush.msra.mxu0 %v979
      %1325 = vmatpush.msra.mxu0 %v978
      %1326 = vmatpush.msra.mxu0 %v977
      %1327 = vmatpush.msra.mxu0 %v976
      %1328 = vmatpush.msra.mxu0 %v975
      %1329 = vmatpush.msra.mxu0 %v974
      %1330 = vmatpush.msra.mxu0 %v973
      %1331 = vmatpush.msra.mxu0 %v972
      %1332 = vmatmul.f32.gmra.mxu0 %v768
      %v1333 = vpop.f32.mrf.mxu0
      %v1334 = vadd.f32 %v1269, %v1333
      %1335 = vmatmul.f32.gmra.mxu0 %v770
      %v1336 = vpop.f32.mrf.mxu0
      %v1337 = vadd.f32 %v1272, %v1336
      %1338 = vmatmul.f32.gmra.mxu0 %v773
      %v1339 = vpop.f32.mrf.mxu0
      %v1340 = vadd.f32 %v1275, %v1339
      %1341 = vmatmul.f32.gmra.mxu0 %v775
      %v1342 = vpop.f32.mrf.mxu0
      %v1343 = vadd.f32 %v1278, %v1342
      %1344 = vmatmul.f32.gmra.mxu0 %v778
      %v1345 = vpop.f32.mrf.mxu0
      %v1346 = vadd.f32 %v1281, %v1345
      %1347 = vmatmul.f32.gmra.mxu0 %v780
      %v1348 = vpop.f32.mrf.mxu0
      %v1349 = vadd.f32 %v1284, %v1348
      %1350 = vmatmul.f32.gmra.mxu0 %v783
      %v1351 = vpop.f32.mrf.mxu0
      %v1352 = vadd.f32 %v1287, %v1351
      %1353 = vmatmul.f32.gmra.mxu0 %v785
      %v1354 = vpop.f32.mrf.mxu0
      %v1355 = vadd.f32 %v1290, %v1354
      %1356 = vmatmul.f32.gmra.mxu0 %v788
      %v1357 = vpop.f32.mrf.mxu0
      %v1358 = vadd.f32 %v1293, %v1357
      %1359 = vmatmul.f32.gmra.mxu0 %v790
      %v1360 = vpop.f32.mrf.mxu0
      %v1361 = vadd.f32 %v1296, %v1360
      %1362 = vmatmul.f32.gmra.mxu0 %v793
      %v1363 = vpop.f32.mrf.mxu0
      %v1364 = vadd.f32 %v1299, %v1363
      %1365 = vmatmul.f32.gmra.mxu0 %v795
      %v1366 = vpop.f32.mrf.mxu0
      %v1367 = vadd.f32 %v1302, %v1366
      %1368 = vmatmul.f32.gmra.mxu0 %v798
      %v1369 = vpop.f32.mrf.mxu0
      %v1370 = vadd.f32 %v1305, %v1369
      %1371 = vmatmul.f32.gmra.mxu0 %v800
      %v1372 = vpop.f32.mrf.mxu0
      %v1373 = vadd.f32 %v1308, %v1372
      %1374 = vmatmul.f32.gmra.mxu0 %v879
      %v1375 = vpop.f32.mrf.mxu0
      %v1376 = vadd.f32 %v1311, %v1375
      %1377 = vmatmul.f32.gmra.mxu0 %v881
      %v1378 = vpop.f32.mrf.mxu0
      %v1379 = vadd.f32 %v1314, %v1378
      %1380 = vdwg.mxu0
      %1381 = vmatpush.msra.mxu0 %v1003
      %1382 = vmatpush.msra.mxu0 %v1002
      %1383 = vmatpush.msra.mxu0 %v1001
      %1384 = vmatpush.msra.mxu0 %v1000
      %1385 = vmatpush.msra.mxu0 %v999
      %1386 = vmatpush.msra.mxu0 %v998
      %1387 = vmatpush.msra.mxu0 %v997
      %1388 = vmatpush.msra.mxu0 %v996
      %1389 = vmatpush.msra.mxu0 %v995
      %1390 = vmatpush.msra.mxu0 %v994
      %1391 = vmatpush.msra.mxu0 %v993
      %1392 = vmatpush.msra.mxu0 %v992
      %1393 = vmatpush.msra.mxu0 %v991
      %1394 = vmatpush.msra.mxu0 %v990
      %1395 = vmatpush.msra.mxu0 %v989
      %1396 = vmatpush.msra.mxu0 %v988
      %1397 = vmatmul.f32.gmra.mxu0 %v825
      %v1398 = vpop.f32.mrf.mxu0
      %v1399 = vadd.f32 %v1334, %v1398
      %1400 = vmatmul.f32.gmra.mxu0 %v827
      %v1401 = vpop.f32.mrf.mxu0
      %v1402 = vadd.f32 %v1337, %v1401
      %1403 = vmatmul.f32.gmra.mxu0 %v830
      %v1404 = vpop.f32.mrf.mxu0
      %v1405 = vadd.f32 %v1340, %v1404
      %1406 = vmatmul.f32.gmra.mxu0 %v832
      %v1407 = vpop.f32.mrf.mxu0
      %v1408 = vadd.f32 %v1343, %v1407
      %1409 = vmatmul.f32.gmra.mxu0 %v835
      %v1410 = vpop.f32.mrf.mxu0
      %v1411 = vadd.f32 %v1346, %v1410
      %1412 = vmatmul.f32.gmra.mxu0 %v837
      %v1413 = vpop.f32.mrf.mxu0
      %v1414 = vadd.f32 %v1349, %v1413
      %1415 = vmatmul.f32.gmra.mxu0 %v840
      %v1416 = vpop.f32.mrf.mxu0
      %v1417 = vadd.f32 %v1352, %v1416
      %1418 = vmatmul.f32.gmra.mxu0 %v842
      %v1419 = vpop.f32.mrf.mxu0
      %v1420 = vadd.f32 %v1355, %v1419
      %1421 = vmatmul.f32.gmra.mxu0 %v845
      %v1422 = vpop.f32.mrf.mxu0
      %v1423 = vadd.f32 %v1358, %v1422
      %1424 = vmatmul.f32.gmra.mxu0 %v847
      %v1425 = vpop.f32.mrf.mxu0
      %v1426 = vadd.f32 %v1361, %v1425
      %1427 = vmatmul.f32.gmra.mxu0 %v850
      %v1428 = vpop.f32.mrf.mxu0
      %v1429 = vadd.f32 %v1364, %v1428
      %1430 = vmatmul.f32.gmra.mxu0 %v852
      %v1431 = vpop.f32.mrf.mxu0
      %v1432 = vadd.f32 %v1367, %v1431
      %1433 = vmatmul.f32.gmra.mxu0 %v855
      %v1434 = vpop.f32.mrf.mxu0
      %v1435 = vadd.f32 %v1370, %v1434
      %1436 = vmatmul.f32.gmra.mxu0 %v857
      %v1437 = vpop.f32.mrf.mxu0
      %v1438 = vadd.f32 %v1373, %v1437
      %1439 = vmatmul.f32.gmra.mxu0 %v886
      %v1440 = vpop.f32.mrf.mxu0
      %v1441 = vadd.f32 %v1376, %v1440
      %1442 = vmatmul.f32.gmra.mxu0 %v888
      %v1443 = vpop.f32.mrf.mxu0
      %v1444 = vadd.f32 %v1379, %v1443
      %1445 = vdwg.mxu0
      %1446 = vmatpush.msra.mxu0 %v1019
      %1447 = vmatpush.msra.mxu0 %v1018
      %1448 = vmatpush.msra.mxu0 %v1017
      %1449 = vmatpush.msra.mxu0 %v1016
      %1450 = vmatpush.msra.mxu0 %v1015
      %1451 = vmatpush.msra.mxu0 %v1014
      %1452 = vmatpush.msra.mxu0 %v1013
      %1453 = vmatpush.msra.mxu0 %v1012
      %1454 = vmatpush.msra.mxu0 %v1011
      %1455 = vmatpush.msra.mxu0 %v1010
      %1456 = vmatpush.msra.mxu0 %v1009
      %1457 = vmatpush.msra.mxu0 %v1008
      %1458 = vmatpush.msra.mxu0 %v1007
      %1459 = vmatpush.msra.mxu0 %v1006
      %1460 = vmatpush.msra.mxu0 %v1005
      %1461 = vmatpush.msra.mxu0 %v1004
      %1462 = vmatmul.f32.gmra.mxu0 %v712
      %v1463 = vpop.f32.mrf.mxu0
      %v1464 = vadd.f32 %v1399, %v1463
      %1465 = vmatmul.f32.gmra.mxu0 %v713
      %v1466 = vpop.f32.mrf.mxu0
      %v1467 = vadd.f32 %v1402, %v1466
      %1468 = vmatmul.f32.gmra.mxu0 %v715
      %v1469 = vpop.f32.mrf.mxu0
      %v1470 = vadd.f32 %v1405, %v1469
      %1471 = vmatmul.f32.gmra.mxu0 %v716
      %v1472 = vpop.f32.mrf.mxu0
      %v1473 = vadd.f32 %v1408, %v1472
      %1474 = vmatmul.f32.gmra.mxu0 %v718
      %v1475 = vpop.f32.mrf.mxu0
      %v1476 = vadd.f32 %v1411, %v1475
      %1477 = vmatmul.f32.gmra.mxu0 %v719
      %v1478 = vpop.f32.mrf.mxu0
      %v1479 = vadd.f32 %v1414, %v1478
      %1480 = vmatmul.f32.gmra.mxu0 %v721
      %v1481 = vpop.f32.mrf.mxu0
      %v1482 = vadd.f32 %v1417, %v1481
      %1483 = vmatmul.f32.gmra.mxu0 %v722
      %v1484 = vpop.f32.mrf.mxu0
      %v1485 = vadd.f32 %v1420, %v1484
      %1486 = vmatmul.f32.gmra.mxu0 %v724
      %v1487 = vpop.f32.mrf.mxu0
      %v1488 = vadd.f32 %v1423, %v1487
      %1489 = vmatmul.f32.gmra.mxu0 %v725
      %v1490 = vpop.f32.mrf.mxu0
      %v1491 = vadd.f32 %v1426, %v1490
      %1492 = vmatmul.f32.gmra.mxu0 %v727
      %v1493 = vpop.f32.mrf.mxu0
      %v1494 = vadd.f32 %v1429, %v1493
      %1495 = vmatmul.f32.gmra.mxu0 %v728
      %v1496 = vpop.f32.mrf.mxu0
      %v1497 = vadd.f32 %v1432, %v1496
      %1498 = vmatmul.f32.gmra.mxu0 %v730
      %v1499 = vpop.f32.mrf.mxu0
      %v1500 = vadd.f32 %v1435, %v1499
      %1501 = vmatmul.f32.gmra.mxu0 %v731
      %v1502 = vpop.f32.mrf.mxu0
      %v1503 = vadd.f32 %v1438, %v1502
      %1504 = vmatmul.f32.gmra.mxu0 %v733
      %v1505 = vpop.f32.mrf.mxu0
      %v1506 = vadd.f32 %v1441, %v1505
      %1507 = vmatmul.f32.gmra.mxu0 %v734
      %v1508 = vpop.f32.mrf.mxu0
      %v1509 = vadd.f32 %v1444, %v1508
      %1510 = vdwg.mxu0
      %1511 = vmatpush.msra.mxu0 %v1035
      %1512 = vmatpush.msra.mxu0 %v1034
      %1513 = vmatpush.msra.mxu0 %v1033
      %1514 = vmatpush.msra.mxu0 %v1032
      %1515 = vmatpush.msra.mxu0 %v1031
      %1516 = vmatpush.msra.mxu0 %v1030
      %1517 = vmatpush.msra.mxu0 %v1029
      %1518 = vmatpush.msra.mxu0 %v1028
      %1519 = vmatpush.msra.mxu0 %v1027
      %1520 = vmatpush.msra.mxu0 %v1026
      %1521 = vmatpush.msra.mxu0 %v1025
      %1522 = vmatpush.msra.mxu0 %v1024
      %1523 = vmatpush.msra.mxu0 %v1023
      %1524 = vmatpush.msra.mxu0 %v1022
      %1525 = vmatpush.msra.mxu0 %v1021
      %1526 = vmatpush.msra.mxu0 %v1020
      %1527 = vmatmul.f32.gmra.mxu0 %v773
      %v1528 = vpop.f32.mrf.mxu0
      %v1529 = vadd.f32 %v1464, %v1528
      %1530 = vmatmul.f32.gmra.mxu0 %v775
      %v1531 = vpop.f32.mrf.mxu0
      %v1532 = vadd.f32 %v1467, %v1531
      %1533 = vmatmul.f32.gmra.mxu0 %v778
      %v1534 = vpop.f32.mrf.mxu0
      %v1535 = vadd.f32 %v1470, %v1534
      %1536 = vmatmul.f32.gmra.mxu0 %v780
      %v1537 = vpop.f32.mrf.mxu0
      %v1538 = vadd.f32 %v1473, %v1537
      %1539 = vmatmul.f32.gmra.mxu0 %v783
      %v1540 = vpop.f32.mrf.mxu0
      %v1541 = vadd.f32 %v1476, %v1540
      %1542 = vmatmul.f32.gmra.mxu0 %v785
      %v1543 = vpop.f32.mrf.mxu0
      %v1544 = vadd.f32 %v1479, %v1543
      %1545 = vmatmul.f32.gmra.mxu0 %v788
      %v1546 = vpop.f32.mrf.mxu0
      %v1547 = vadd.f32 %v1482, %v1546
      %1548 = vmatmul.f32.gmra.mxu0 %v790
      %v1549 = vpop.f32.mrf.mxu0
      %v1550 = vadd.f32 %v1485, %v1549
      %1551 = vmatmul.f32.gmra.mxu0 %v793
      %v1552 = vpop.f32.mrf.mxu0
      %v1553 = vadd.f32 %v1488, %v1552
      %1554 = vmatmul.f32.gmra.mxu0 %v795
      %v1555 = vpop.f32.mrf.mxu0
      %v1556 = vadd.f32 %v1491, %v1555
      %1557 = vmatmul.f32.gmra.mxu0 %v798
      %v1558 = vpop.f32.mrf.mxu0
      %v1559 = vadd.f32 %v1494, %v1558
      %1560 = vmatmul.f32.gmra.mxu0 %v800
      %v1561 = vpop.f32.mrf.mxu0
      %v1562 = vadd.f32 %v1497, %v1561
      %1563 = vmatmul.f32.gmra.mxu0 %v879
      %v1564 = vpop.f32.mrf.mxu0
      %v1565 = vadd.f32 %v1500, %v1564
      %1566 = vmatmul.f32.gmra.mxu0 %v881
      %v1567 = vpop.f32.mrf.mxu0
      %v1568 = vadd.f32 %v1503, %v1567
      %1569 = vmatmul.f32.gmra.mxu0 %v896
      %v1570 = vpop.f32.mrf.mxu0
      %v1571 = vadd.f32 %v1506, %v1570
      %1572 = vmatmul.f32.gmra.mxu0 %v898
      %v1573 = vpop.f32.mrf.mxu0
      %v1574 = vadd.f32 %v1509, %v1573
      %1575 = vdwg.mxu0
      %1576 = vmatpush.msra.mxu0 %v1051
      %1577 = vmatpush.msra.mxu0 %v1050
      %1578 = vmatpush.msra.mxu0 %v1049
      %1579 = vmatpush.msra.mxu0 %v1048
      %1580 = vmatpush.msra.mxu0 %v1047
      %1581 = vmatpush.msra.mxu0 %v1046
      %1582 = vmatpush.msra.mxu0 %v1045
      %1583 = vmatpush.msra.mxu0 %v1044
      %1584 = vmatpush.msra.mxu0 %v1043
      %1585 = vmatpush.msra.mxu0 %v1042
      %1586 = vmatpush.msra.mxu0 %v1041
      %1587 = vmatpush.msra.mxu0 %v1040
      %1588 = vmatpush.msra.mxu0 %v1039
      %1589 = vmatpush.msra.mxu0 %v1038
      %1590 = vmatpush.msra.mxu0 %v1037
      %1591 = vmatpush.msra.mxu0 %v1036
      %1592 = vmatmul.f32.gmra.mxu0 %v830
      %v1593 = vpop.f32.mrf.mxu0
      %v1594 = vadd.f32 %v1529, %v1593
      %1595 = vmatmul.f32.gmra.mxu0 %v832
      %v1596 = vpop.f32.mrf.mxu0
      %v1597 = vadd.f32 %v1532, %v1596
      %1598 = vmatmul.f32.gmra.mxu0 %v835
      %v1599 = vpop.f32.mrf.mxu0
      %v1600 = vadd.f32 %v1535, %v1599
      %1601 = vmatmul.f32.gmra.mxu0 %v837
      %v1602 = vpop.f32.mrf.mxu0
      %v1603 = vadd.f32 %v1538, %v1602
      %1604 = vmatmul.f32.gmra.mxu0 %v840
      %v1605 = vpop.f32.mrf.mxu0
      %v1606 = vadd.f32 %v1541, %v1605
      %1607 = vmatmul.f32.gmra.mxu0 %v842
      %v1608 = vpop.f32.mrf.mxu0
      %v1609 = vadd.f32 %v1544, %v1608
      %1610 = vmatmul.f32.gmra.mxu0 %v845
      %v1611 = vpop.f32.mrf.mxu0
      %v1612 = vadd.f32 %v1547, %v1611
      %1613 = vmatmul.f32.gmra.mxu0 %v847
      %v1614 = vpop.f32.mrf.mxu0
      %v1615 = vadd.f32 %v1550, %v1614
      %1616 = vmatmul.f32.gmra.mxu0 %v850
      %v1617 = vpop.f32.mrf.mxu0
      %v1618 = vadd.f32 %v1553, %v1617
      %1619 = vmatmul.f32.gmra.mxu0 %v852
      %v1620 = vpop.f32.mrf.mxu0
      %v1621 = vadd.f32 %v1556, %v1620
      %1622 = vmatmul.f32.gmra.mxu0 %v855
      %v1623 = vpop.f32.mrf.mxu0
      %v1624 = vadd.f32 %v1559, %v1623
      %1625 = vmatmul.f32.gmra.mxu0 %v857
      %v1626 = vpop.f32.mrf.mxu0
      %v1627 = vadd.f32 %v1562, %v1626
      %1628 = vmatmul.f32.gmra.mxu0 %v886
      %v1629 = vpop.f32.mrf.mxu0
      %v1630 = vadd.f32 %v1565, %v1629
      %1631 = vmatmul.f32.gmra.mxu0 %v888
      %v1632 = vpop.f32.mrf.mxu0
      %v1633 = vadd.f32 %v1568, %v1632
      %1634 = vmatmul.f32.gmra.mxu0 %v903
      %v1635 = vpop.f32.mrf.mxu0
      %v1636 = vadd.f32 %v1571, %v1635
      %1637 = vmatmul.f32.gmra.mxu0 %v905
      %v1638 = vpop.f32.mrf.mxu0
      %v1639 = vadd.f32 %v1574, %v1638
      %1640 = vdwg.mxu0
      %v1641 = vmax.f32 %v1594, 0.0
      %v1642 = vmax.f32 %v1597, 0.0
      %v1643 = vmax.f32 %v1600, 0.0
      %v1644 = vmax.f32 %v1603, 0.0
      %v1645 = vmax.f32 %v1606, 0.0
      %v1646 = vmax.f32 %v1609, 0.0
      %v1647 = vmax.f32 %v1612, 0.0
      %v1648 = vmax.f32 %v1615, 0.0
      %v1649 = vmax.f32 %v1618, 0.0
      %v1650 = vmax.f32 %v1621, 0.0
      %v1651 = vmax.f32 %v1624, 0.0
      %v1652 = vmax.f32 %v1627, 0.0
      %v1653 = vmax.f32 %v1630, 0.0
      %v1654 = vmax.f32 %v1633, 0.0
      %v1655 = vmax.f32 %v1636, 0.0
      %v1656 = vmax.f32 %v1639, 0.0
      %v1681 = vrot.slane %v464, 1
      %v1682 = vrot.slane %v465, 1
      %v1683 = vsel %vm760, %v1681, %v1682
      %v1684 = vrot.slane %v466, 1
      %v1685 = vsel %vm760, %v1682, %v1684
      %v1686 = vrot.slane %v467, 1
      %v1687 = vrot.slane %v468, 1
      %v1688 = vsel %vm760, %v1686, %v1687
      %v1689 = vrot.slane %v469, 1
      %v1690 = vsel %vm760, %v1687, %v1689
      %v1691 = vrot.slane %v470, 1
      %v1692 = vrot.slane %v471, 1
      %v1693 = vsel %vm760, %v1691, %v1692
      %v1694 = vrot.slane %v472, 1
      %v1695 = vsel %vm760, %v1692, %v1694
      %v1696 = vrot.slane %v473, 1
      %v1697 = vrot.slane %v474, 1
      %v1698 = vsel %vm760, %v1696, %v1697
      %v1699 = vrot.slane %v475, 1
      %v1700 = vsel %vm760, %v1697, %v1699
      %v1701 = vrot.slane %v476, 1
      %v1702 = vrot.slane %v477, 1
      %v1703 = vsel %vm760, %v1701, %v1702
      %v1704 = vrot.slane %v478, 1
      %v1705 = vsel %vm760, %v1702, %v1704
      %v1706 = vrot.slane %v479, 1
      %v1707 = vrot.slane %v480, 1
      %v1708 = vsel %vm760, %v1706, %v1707
      %v1709 = vrot.slane %v481, 1
      %v1710 = vsel %vm760, %v1707, %v1709
      %v1711 = vrot.slane %v482, 1
      %v1712 = vrot.slane %v483, 1
      %v1713 = vsel %vm760, %v1711, %v1712
      %v1714 = vrot.slane %v484, 1
      %v1715 = vsel %vm760, %v1712, %v1714
      %v1716 = vrot.slane %v485, 1
      %v1717 = vrot.slane %v486, 1
      %v1718 = vsel %vm760, %v1716, %v1717
      %v1719 = vrot.slane %v487, 1
      %v1720 = vsel %vm760, %v1717, %v1719
      %v1737 = vld [vmem:[%s5] sm:$0xff]
      %v1738 = vld [vmem:[%s5 + $0x8] sm:$0xff]
      %v1739 = vld [vmem:[%s5 + $0x10] sm:$0xff]
      %v1740 = vld [vmem:[%s5 + $0x18] sm:$0xff]
      %v1741 = vld [vmem:[%s5 + $0x20] sm:$0xff]
      %v1742 = vld [vmem:[%s5 + $0x28] sm:$0xff]
      %v1743 = vld [vmem:[%s5 + $0x30] sm:$0xff]
      %v1744 = vld [vmem:[%s5 + $0x38] sm:$0xff]
      %v1745 = vld [vmem:[%s5 + $0x40] sm:$0xff]
      %v1746 = vld [vmem:[%s5 + $0x48] sm:$0xff]
      %v1747 = vld [vmem:[%s5 + $0x50] sm:$0xff]
      %v1748 = vld [vmem:[%s5 + $0x58] sm:$0xff]
      %v1749 = vld [vmem:[%s5 + $0x60] sm:$0xff]
      %v1750 = vld [vmem:[%s5 + $0x68] sm:$0xff]
      %v1751 = vld [vmem:[%s5 + $0x70] sm:$0xff]
      %v1752 = vld [vmem:[%s5 + $0x78] sm:$0xff]
      %v1753 = vld [vmem:[%s6] sm:$0x1]
      %v1755 = vperm.slane %v1753, 0
      %1757 = vmatpush.msra.mxu0 %v1752
      %1758 = vmatpush.msra.mxu0 %v1751
      %1759 = vmatpush.msra.mxu0 %v1750
      %1760 = vmatpush.msra.mxu0 %v1749
      %1761 = vmatpush.msra.mxu0 %v1748
      %1762 = vmatpush.msra.mxu0 %v1747
      %1763 = vmatpush.msra.mxu0 %v1746
      %1764 = vmatpush.msra.mxu0 %v1745
      %1765 = vmatpush.msra.mxu0 %v1744
      %1766 = vmatpush.msra.mxu0 %v1743
      %1767 = vmatpush.msra.mxu0 %v1742
      %1768 = vmatpush.msra.mxu0 %v1741
      %1769 = vmatpush.msra.mxu0 %v1740
      %1770 = vmatpush.msra.mxu0 %v1739
      %1771 = vmatpush.msra.mxu0 %v1738
      %1772 = vmatpush.msra.mxu0 %v1737
      %1773 = vmatmul.f32.gmra.mxu0 %v1641
      %v1774 = vpop.f32.mrf.mxu0
      %v1775 = vadd.f32 %v1755, %v1774
      %1776 = vmatmul.f32.gmra.mxu0 %v1642
      %v1777 = vpop.f32.mrf.mxu0
      %v1778 = vadd.f32 %v1755, %v1777
      %1779 = vmatmul.f32.gmra.mxu0 %v1643
      %v1780 = vpop.f32.mrf.mxu0
      %v1781 = vadd.f32 %v1755, %v1780
      %1782 = vmatmul.f32.gmra.mxu0 %v1644
      %v1783 = vpop.f32.mrf.mxu0
      %v1784 = vadd.f32 %v1755, %v1783
      %1785 = vmatmul.f32.gmra.mxu0 %v1645
      %v1786 = vpop.f32.mrf.mxu0
      %v1787 = vadd.f32 %v1755, %v1786
      %1788 = vmatmul.f32.gmra.mxu0 %v1646
      %v1789 = vpop.f32.mrf.mxu0
      %v1790 = vadd.f32 %v1755, %v1789
      %1791 = vmatmul.f32.gmra.mxu0 %v1647
      %v1792 = vpop.f32.mrf.mxu0
      %v1793 = vadd.f32 %v1755, %v1792
      %1794 = vmatmul.f32.gmra.mxu0 %v1648
      %v1795 = vpop.f32.mrf.mxu0
      %v1796 = vadd.f32 %v1755, %v1795
      %1797 = vmatmul.f32.gmra.mxu0 %v1649
      %v1798 = vpop.f32.mrf.mxu0
      %v1799 = vadd.f32 %v1755, %v1798
      %1800 = vmatmul.f32.gmra.mxu0 %v1650
      %v1801 = vpop.f32.mrf.mxu0
      %v1802 = vadd.f32 %v1755, %v1801
      %1803 = vmatmul.f32.gmra.mxu0 %v1651
      %v1804 = vpop.f32.mrf.mxu0
      %v1805 = vadd.f32 %v1755, %v1804
      %1806 = vmatmul.f32.gmra.mxu0 %v1652
      %v1807 = vpop.f32.mrf.mxu0
      %v1808 = vadd.f32 %v1755, %v1807
      %1809 = vmatmul.f32.gmra.mxu0 %v1653
      %v1810 = vpop.f32.mrf.mxu0
      %v1811 = vadd.f32 %v1755, %v1810
      %1812 = vmatmul.f32.gmra.mxu0 %v1654
      %v1813 = vpop.f32.mrf.mxu0
      %v1814 = vadd.f32 %v1755, %v1813
      %1815 = vmatmul.f32.gmra.mxu0 %v1655
      %v1816 = vpop.f32.mrf.mxu0
      %v1817 = vadd.f32 %v1755, %v1816
      %1818 = vmatmul.f32.gmra.mxu0 %v1656
      %v1819 = vpop.f32.mrf.mxu0
      %v1820 = vadd.f32 %v1755, %v1819
      %1821 = vdwg.mxu0
      %v1822 = vadd.f32 %v1775, %v1683
      %v1823 = vadd.f32 %v1778, %v1685
      %v1824 = vadd.f32 %v1781, %v1688
      %v1825 = vadd.f32 %v1784, %v1690
      %v1826 = vadd.f32 %v1787, %v1693
      %v1827 = vadd.f32 %v1790, %v1695
      %v1828 = vadd.f32 %v1793, %v1698
      %v1829 = vadd.f32 %v1796, %v1700
      %v1830 = vadd.f32 %v1799, %v1703
      %v1831 = vadd.f32 %v1802, %v1705
      %v1832 = vadd.f32 %v1805, %v1708
      %v1833 = vadd.f32 %v1808, %v1710
      %v1834 = vadd.f32 %v1811, %v1713
      %v1835 = vadd.f32 %v1814, %v1715
      %v1836 = vadd.f32 %v1817, %v1718
      %v1837 = vadd.f32 %v1820, %v1720
      %v1838 = vmax.f32 %v1822, 0.0
      %v1839 = vmax.f32 %v1823, 0.0
      %v1840 = vmax.f32 %v1824, 0.0
      %v1841 = vmax.f32 %v1825, 0.0
      %v1842 = vmax.f32 %v1826, 0.0
      %v1843 = vmax.f32 %v1827, 0.0
      %v1844 = vmax.f32 %v1828, 0.0
      %v1845 = vmax.f32 %v1829, 0.0
      %v1846 = vmax.f32 %v1830, 0.0
      %v1847 = vmax.f32 %v1831, 0.0
      %v1848 = vmax.f32 %v1832, 0.0
      %v1849 = vmax.f32 %v1833, 0.0
      %v1850 = vmax.f32 %v1834, 0.0
      %v1851 = vmax.f32 %v1835, 0.0
      %v1852 = vmax.f32 %v1836, 0.0
      %v1853 = vmax.f32 %v1837, 0.0
      %1854 = vst [vmem:[%s256] sm:$0xff] %v1838
      %1855 = vst [vmem:[%s256 + $0x8] sm:$0xff] %v1839
      %1856 = vst [vmem:[%s256 + $0x10] sm:$0xff] %v1840
      %1857 = vst [vmem:[%s256 + $0x18] sm:$0xff] %v1841
      %1858 = vst [vmem:[%s256 + $0x20] sm:$0xff] %v1842
      %1859 = vst [vmem:[%s256 + $0x28] sm:$0xff] %v1843
      %1860 = vst [vmem:[%s256 + $0x30] sm:$0xff] %v1844
      %1861 = vst [vmem:[%s256 + $0x38] sm:$0xff] %v1845
      %1862 = vst [vmem:[%s256 + $0x40] sm:$0xff] %v1846
      %1863 = vst [vmem:[%s256 + $0x48] sm:$0xff] %v1847
      %1864 = vst [vmem:[%s256 + $0x50] sm:$0xff] %v1848
      %1865 = vst [vmem:[%s256 + $0x58] sm:$0xff] %v1849
      %1866 = vst [vmem:[%s256 + $0x60] sm:$0xff] %v1850
      %1867 = vst [vmem:[%s256 + $0x68] sm:$0xff] %v1851
      %1868 = vst [vmem:[%s256 + $0x70] sm:$0xff] %v1852
      %1869 = vst [vmem:[%s256 + $0x78] sm:$0xff] %v1853
      %s1870 = smul.u32 8, %s23
      %p1871 = scmp.lt.s32.totalorder %s22, 1
      %s1872 = scalar_select %p1871, %s22, 1
      %p1873 = scmp.lt.s32.totalorder %s1870, 15
      %s1874 = scalar_select %p1873, %s1870, 15
      %s1875 = smul.addr %s1874, 2
      %s1876 = smul.addr %s1872, 32
      %s1877 = sadd.s32 %s1875, %s1876
      %s1878 = smul.addr %s1877, 8
      %s1879 = scalar_lea.vmem %s7, %s1878
      // Predicated region
      $region91: #{_lambda_.1} parent=43 // pred_check
        %p1880 = pneg %p176
      $region92: #{_lambda_.1} parent=43 // pred_check_branch
        %1882 = sbr.rel (%p1880) target = $region94
      $region93: #{_lambda_.1} parent=43 // pred_region
        %s1883 = smul.u32 8, %s23
      $region94: #{_lambda_.1} parent=43 // pred_fallthru
        _
    $region44: #{_lambda_.1} parent=5 // pred_fallthru
      _
    %p1884 = scmp.le.s32.totalorder 2, %s13
    // Predicated region
    $region95: #{_lambda_.1} parent=5 // pred_check
      %p1885 = pneg %p1884
    $region96: #{_lambda_.1} parent=5 // pred_check_branch
      %1887 = sbr.rel (%p1885) target = $region98
    $region97: #{_lambda_.1} parent=5 // pred_region
      %s1888 = ssub.s32 %s13, 2
      // Predicated region
      $region99: #{_lambda_.1} parent=97 // pred_check
        %p1889 = pneg %p182
      $region100: #{_lambda_.1} parent=97 // pred_check_branch
        %1891 = sbr.rel (%p1889) target = $region102
      $region101: #{_lambda_.1} parent=97 // pred_region
        %s1892 = smul.u32 8, %s25
        %p1893 = scmp.lt.s32.totalorder %s24, 1
        %s1894 = scalar_select %p1893, %s24, 1
        %p1895 = scmp.lt.s32.totalorder %s1892, 15
        %s1896 = scalar_select %p1895, %s1892, 15
        %s1897 = smul.addr %s1896, 2
        %s1898 = smul.addr %s1894, 32
        %s1899 = sadd.s32 %s1897, %s1898
        %s1900 = smul.addr %s1899, 8
        %s1901 = scalar_lea.vmem %s7, %s1900
      $region102: #{_lambda_.1} parent=97 // pred_fallthru
        _
    $region98: #{_lambda_.1} parent=5 // pred_fallthru
      _
  $region6: #{_lambda_.1} parent=0 // loop_footer
    %s17 = sadd.s32 1, %s13
  $region7: #{_lambda_.1} parent=0 // loop_footer_branch
    %12 = sbr.rel target = $region3
  $region8: #{_lambda_.1} parent=0 // loop_exit
    _
  %1902 = vsyncmov [#allocation3]
  %s1903 = vpop.sfrf %1902
  %p1904 = scmp.eq.s32.totalorder %s1903, 0
  %p1905 = pneg %p1904
  %1907 = shalt.err (%p1905)
  %s1908 = scalar_lea.sflag [#allocation3], 1
  %1909 = vsyncmov %s1908
  %s1910 = vpop.sfrf %1909
  %p1911 = scmp.eq.s32.totalorder %s1910, 0
  %p1912 = pneg %p1911
  %1914 = shalt.err (%p1912)

</llo_original>
